<compile_context>
chip_gen: v7x
topology: tpu7x:2x2x1
jax: 0.10.0
libtpu: 0.0.40
codegen_flags: <defaults>
</compile_context>

<pallas_src>
import functools

import jax
import jax.numpy as jnp
from jax.experimental import pallas as pl
from jax.experimental.pallas import tpu as pltpu


def _erf_poly(z):
    """Abramowitz & Stegun 7.1.26 erf approximation (|error| <= 1.5e-7), f32.

    Built only from exp/abs/mul/div/where so it always lowers on Mosaic.
    """
    a1, a2, a3, a4, a5 = (0.254829592, -0.284496736, 1.421413741,
                          -1.453152027, 1.061405429)
    p = 0.3275911
    az = jnp.abs(z)
    t = 1.0 / (1.0 + p * az)
    poly = ((((a5 * t + a4) * t + a3) * t + a2) * t + a1) * t
    e = 1.0 - poly * jnp.exp(-az * az)
    return jnp.where(z >= 0, e, -e)


def _transformer_layer_kernel(
    xq_ref,    # (1, tn, dim) f32  — query-side tile of x (also the residual stream)
    xkv_ref,   # (1, n,  dim) f32  — full sequence (source of K/V)
    wq_ref,    # (H, dim, hd) bf16 — per-head Q weights, sqrt(hd) scaling folded in
    wk_ref,    # (H, dim, hd) bf16
    wv_ref,    # (H, dim, hd) bf16
    wo_ref,    # (H, hd, dim) bf16 — per-head rows of the output projection
    w1_ref,    # (dim, dff)   bf16
    w2_ref,    # (dff, dim)   bf16
    b1_ref,    # (1, dff)     f32
    vecs_ref,  # (8, dim)     f32  rows: bo, b2, g1, be1, g2, be2, 0, 0
    o_ref,     # (1, tn, dim)
    acc_ref,   # VMEM scratch (tn, dim) f32 — attention-output accumulator
    *, num_heads, eps,
):
    f32 = jnp.float32
    bf16 = jnp.bfloat16

    xq = xq_ref[0]                        # (tn, dim) f32 residual stream
    xq_bf = xq.astype(bf16)
    xkv_bf = xkv_ref[0].astype(bf16)      # (n, dim) bf16

    acc_ref[...] = jnp.zeros_like(acc_ref)

    def head_body(h, carry):
        # Per-head projections: contract the full `dim` (MXU well-fed),
        # weights are pre-split per head so no lane slicing is needed.
        qh = jnp.dot(xq_bf, wq_ref[h], preferred_element_type=f32)    # (tn, hd)
        kh = jnp.dot(xkv_bf, wk_ref[h], preferred_element_type=f32)   # (n,  hd)
        vh = jnp.dot(xkv_bf, wv_ref[h], preferred_element_type=f32)   # (n,  hd)

        # scores = qh @ kh^T without materializing a transpose.
        s = jax.lax.dot_general(
            qh.astype(bf16), kh.astype(bf16),
            (((1,), (1,)), ((), ())),
            preferred_element_type=f32)                                # (tn, n)

        # softmax over keys (f32), approx reciprocal on the EUP.
        s = s - jnp.max(s, axis=-1, keepdims=True)
        p = jnp.exp(s)
        p = p * pl.reciprocal(jnp.sum(p, axis=-1, keepdims=True), approx=True)

        oh = jnp.dot(p.astype(bf16), vh.astype(bf16),
                     preferred_element_type=f32)                       # (tn, hd)

        # attn @ Wo == sum_h oh @ Wo[h*hd:(h+1)*hd, :]  (exact), so fold the
        # output projection into the head loop -> no concatenate needed.
        acc_ref[...] += jnp.dot(oh.astype(bf16), wo_ref[h],
                                preferred_element_type=f32)            # (tn, dim)
        return carry

    jax.lax.fori_loop(0, num_heads, head_body, 0, unroll=True)

    vecs = vecs_ref[...]                  # (8, dim) f32
    bo, b2 = vecs[0:1], vecs[1:2]
    g1, be1 = vecs[2:3], vecs[3:4]
    g2, be2 = vecs[4:5], vecs[5:6]

    attn = acc_ref[...] + bo              # (tn, dim)

    # ---- residual + LayerNorm 1 (f32) --------------------------------------
    x1 = xq + attn
    mu1 = jnp.mean(x1, axis=-1, keepdims=True)
    var1 = jnp.mean(jnp.square(x1 - mu1), axis=-1, keepdims=True)
    x1n = (x1 - mu1) * jax.lax.rsqrt(var1 + eps) * g1 + be1

    # ---- feed-forward: Linear -> GELU(exact erf) -> Linear ------------------
    h1 = jnp.dot(x1n.astype(bf16), w1_ref[...],
                 preferred_element_type=f32) + b1_ref[...]             # (tn, dff)
    h1 = 0.5 * h1 * (1.0 + _erf_poly(h1 * 0.7071067811865476))
    ff = jnp.dot(h1.astype(bf16), w2_ref[...],
                 preferred_element_type=f32) + b2                      # (tn, dim)

    # ---- residual + LayerNorm 2 (f32) --------------------------------------
    x2 = x1n + ff
    mu2 = jnp.mean(x2, axis=-1, keepdims=True)
    var2 = jnp.mean(jnp.square(x2 - mu2), axis=-1, keepdims=True)
    out = (x2 - mu2) * jax.lax.rsqrt(var2 + eps) * g2 + be2

    o_ref[0] = out.astype(o_ref.dtype)


def transformer_model_layer(x, params, *, num_heads, tile_n=None,
                            compute_dtype=jnp.bfloat16):
    """x: (n, b, dim) seq-first layout, matching the PyTorch module."""
    n, b, dim = x.shape
    hd = dim // num_heads
    assert hd * num_heads == dim
    scaling = float(hd) ** 0.5   # NOTE: multiplies by sqrt(head_dim), as in the reference
    dff = params["w1"].shape[0]
    f32 = jnp.float32

    # ---- sequence tiling ----------------------------------------------------
    if tile_n is None:
        tile_n = n if n <= 128 else 128
    if n % tile_n != 0 or (tile_n < n and tile_n % 8 != 0):
        tile_n = n            # fall back to whole-sequence block
    n_tiles = n // tile_n

    # ---- weight preparation (wrapper-side, amortized over the whole grid) ---
    # PyTorch Linear weights are (out, in); transpose to (in, out), split heads,
    # fold the q scaling into Wq, cast matmul operands to bf16.
    wq_h = (params["wq"].T.astype(f32) * scaling).reshape(dim, num_heads, hd)
    wq_h = wq_h.transpose(1, 0, 2).astype(compute_dtype)                 # (H, dim, hd)
    wk_h = params["wk"].T.reshape(dim, num_heads, hd).transpose(1, 0, 2).astype(compute_dtype)
    wv_h = params["wv"].T.reshape(dim, num_heads, hd).transpose(1, 0, 2).astype(compute_dtype)
    wo_h = params["wo"].T.reshape(num_heads, hd, dim).astype(compute_dtype)  # (H, hd, dim)
    w1_t = params["w1"].T.astype(compute_dtype)                          # (dim, dff)
    w2_t = params["w2"].T.astype(compute_dtype)                          # (dff, dim)
    b1 = params["b1"].reshape(1, dff).astype(f32)

    zero_row = jnp.zeros((dim,), f32)
    vecs = jnp.stack([params["bo"], params["b2"], params["g1"], params["be1"],
                      params["g2"], params["be2"], zero_row, zero_row]).astype(f32)  # (8, dim)

    x_bnd = jnp.transpose(x, (1, 0, 2)).astype(f32)                      # (b, n, dim)

    kernel = functools.partial(_transformer_layer_kernel,
                               num_heads=num_heads, eps=1e-5)

    # ---- VMEM budget hint ----------------------------------------------------
    weight_bytes = sum(int(a.size) * a.dtype.itemsize
                       for a in (wq_h, wk_h, wv_h, wo_h, w1_t, w2_t, b1, vecs))
    act_bytes = 4 * (3 * tile_n * dim + n * dim + tile_n * dff + tile_n * n)
    vmem_limit = int(min(64 * 1024 * 1024,
                         max(32 * 1024 * 1024, 3 * (weight_bytes + act_bytes))))

    def const(shape):
        return pl.BlockSpec(shape, lambda i, j: tuple(0 for _ in shape))

    out_bnd = pl.pallas_call(
        kernel,
        out_shape=jax.ShapeDtypeStruct((b, n, dim), x.dtype),
        grid=(b, n_tiles),
        in_specs=[
            pl.BlockSpec((1, tile_n, dim), lambda i, j: (i, j, 0)),   # x query tile
            pl.BlockSpec((1, n, dim), lambda i, j: (i, 0, 0)),        # x full seq (K/V)
            const((num_heads, dim, hd)),   # Wq per head (scaled)
            const((num_heads, dim, hd)),   # Wk per head
            const((num_heads, dim, hd)),   # Wv per head
            const((num_heads, hd, dim)),   # Wo per head
            const((dim, dff)),             # W1^T
            const((dff, dim)),             # W2^T
            const((1, dff)),               # b1
            const((8, dim)),               # packed bo/b2/gamma1/beta1/gamma2/beta2
        ],
        out_specs=pl.BlockSpec((1, tile_n, dim), lambda i, j: (i, j, 0)),
        scratch_shapes=[pltpu.VMEM((tile_n, dim), jnp.float32)],
        compiler_params=pltpu.CompilerParams(
            dimension_semantics=("parallel", "parallel"),
            vmem_limit_bytes=vmem_limit,
        ),
    )(x_bnd, x_bnd, wq_h, wk_h, wv_h, wo_h, w1_t, w2_t, b1, vecs)

    return jnp.transpose(out_bnd, (1, 0, 2))  # back to (n, b, dim)


def _reference_jax(x, params, *, num_heads):
    """Pure-JAX f32 reference mirroring the PyTorch module (dropout = identity)."""
    n, b, dim = x.shape
    hd = dim // num_heads
    scaling = float(hd) ** 0.5

    def lin(a, w, bias=None):
        y = jnp.einsum("nbd,od->nbo", a, w)
        return y if bias is None else y + bias

    q = lin(x, params["wq"]) * scaling
    k = lin(x, params["wk"])
    v = lin(x, params["wv"])

    def to_heads(t):  # (n, b, dim) -> (b*H, n, hd)
        return jnp.transpose(t.reshape(n, b * num_heads, hd), (1, 0, 2))

    qh, kh, vh = to_heads(q), to_heads(k), to_heads(v)
    s = jnp.einsum("bnd,bmd->bnm", qh, kh)
    p = jax.nn.softmax(s, axis=2)
    ao = jnp.einsum("bnm,bmd->bnd", p, vh)               # (b*H, n, hd)
    ao = jnp.transpose(ao, (1, 0, 2)).reshape(n, b, dim)  # (n, b, dim)
    ao = lin(ao, params["wo"], params["bo"])

    def layer_norm(t, g, be):
        mu = jnp.mean(t, axis=-1, keepdims=True)
        var = jnp.mean((t - mu) ** 2, axis=-1, keepdims=True)
        return (t - mu) * jax.lax.rsqrt(var + 1e-5) * g + be

    x1 = layer_norm(x + ao, params["g1"], params["be1"])
    h1 = lin(x1, params["w1"], params["b1"])
    h1 = 0.5 * h1 * (1.0 + jax.scipy.special.erf(h1 / jnp.sqrt(jnp.float32(2.0))))
    ff = lin(h1, params["w2"], params["b2"])
    return layer_norm(x1 + ff, params["g2"], params["be2"])


if __name__ == "__main__":
    # Small, shape-consistent example: seq n=8, batch b=2, dim=32, heads=4, dff=64
    n, b, dim, heads, dff = 8, 2, 32, 4, 64

    key = jax.random.PRNGKey(0)
    keys = jax.random.split(key, 16)
    f32 = jnp.float32
    params = {
        "wq": 0.05 * jax.random.normal(keys[0], (dim, dim), f32),
        "wk": 0.05 * jax.random.normal(keys[1], (dim, dim), f32),
        "wv": 0.05 * jax.random.normal(keys[2], (dim, dim), f32),
        "wo": 0.05 * jax.random.normal(keys[3], (dim, dim), f32),
        "bo": 0.05 * jax.random.normal(keys[4], (dim,), f32),
        "w1": 0.05 * jax.random.normal(keys[5], (dff, dim), f32),
        "b1": 0.05 * jax.random.normal(keys[6], (dff,), f32),
        "w2": 0.05 * jax.random.normal(keys[7], (dim, dff), f32),
        "b2": 0.05 * jax.random.normal(keys[8], (dim,), f32),
        "g1": jnp.ones((dim,), f32),
        "be1": jnp.zeros((dim,), f32),
        "g2": jnp.ones((dim,), f32),
        "be2": jnp.zeros((dim,), f32),
    }

    x = jax.random.normal(keys[9], (n, b, dim), f32)

    out = transformer_model_layer(x, params, num_heads=heads)
    out = jax.block_until_ready(out)

    ref = _reference_jax(x, params, num_heads=heads)
    assert out.shape == (n, b, dim)
    # bf16 MXU inputs (f32 accumulation) -> slightly looser tolerance than pure f32.
    assert jnp.allclose(out, ref, atol=3e-2, rtol=3e-2), "mismatch vs reference"

    print("KERNEL_OK")
</pallas_src>

<mosaic_0001>
module attributes {stable_mosaic.version = 11 : i64} {
  func.func @_transformer_layer_kernel(%arg0: i32, %arg1: i32, %arg2: memref<1x8x32xf32, #tpu.memory_space<vmem>>, %arg3: memref<1x8x32xf32, #tpu.memory_space<vmem>>, %arg4: memref<4x32x8xbf16, #tpu.memory_space<vmem>>, %arg5: memref<4x32x8xbf16, #tpu.memory_space<vmem>>, %arg6: memref<4x32x8xbf16, #tpu.memory_space<vmem>>, %arg7: memref<4x8x32xbf16, #tpu.memory_space<vmem>>, %arg8: memref<32x64xbf16, #tpu.memory_space<vmem>>, %arg9: memref<64x32xbf16, #tpu.memory_space<vmem>>, %arg10: memref<1x64xf32, #tpu.memory_space<vmem>>, %arg11: memref<8x32xf32, #tpu.memory_space<vmem>>, %arg12: memref<1x8x32xf32, #tpu.memory_space<vmem>>, %arg13: memref<8x32xf32, #tpu.memory_space<vmem>>) attributes {dimension_semantics = [#tpu.dimension_semantics<parallel>, #tpu.dimension_semantics<parallel>], iteration_bounds = array<i64: 2, 1>, scalar_prefetch = 0 : i64, scratch_operands = 1 : i64, tpu.core_type = #tpu.core_type<tc>, window_params = [{transform_indices = @transform_0, window_bounds = array<i64: 1, 8, 32>}, {transform_indices = @transform_1, window_bounds = array<i64: 1, 8, 32>}, {pipeline_mode = #tpu.pipeline_mode<synchronous>, transform_indices = @transform_2, window_bounds = array<i64: 4, 32, 8>}, {pipeline_mode = #tpu.pipeline_mode<synchronous>, transform_indices = @transform_3, window_bounds = array<i64: 4, 32, 8>}, {pipeline_mode = #tpu.pipeline_mode<synchronous>, transform_indices = @transform_4, window_bounds = array<i64: 4, 32, 8>}, {pipeline_mode = #tpu.pipeline_mode<synchronous>, transform_indices = @transform_5, window_bounds = array<i64: 4, 8, 32>}, {pipeline_mode = #tpu.pipeline_mode<synchronous>, transform_indices = @transform_6, window_bounds = array<i64: 32, 64>}, {pipeline_mode = #tpu.pipeline_mode<synchronous>, transform_indices = @transform_7, window_bounds = array<i64: 64, 32>}, {pipeline_mode = #tpu.pipeline_mode<synchronous>, transform_indices = @transform_8, window_bounds = array<i64: 1, 64>}, {pipeline_mode = #tpu.pipeline_mode<synchronous>, transform_indices = @transform_9, window_bounds = array<i64: 8, 32>}, {transform_indices = @transform_10, window_bounds = array<i64: 1, 8, 32>}]} {
    %c0 = arith.constant 0 : index
    %c0_0 = arith.constant 0 : index
    %c0_1 = arith.constant 0 : index
    %0 = vector.load %arg2[%c0, %c0_0, %c0_1] : memref<1x8x32xf32, #tpu.memory_space<vmem>>, vector<1x8x32xf32>
    %1 = vector.shape_cast %0 : vector<1x8x32xf32> to vector<8x32xf32>
    %2 = arith.truncf %1 : vector<8x32xf32> to vector<8x32xbf16>
    %c0_2 = arith.constant 0 : index
    %c0_3 = arith.constant 0 : index
    %c0_4 = arith.constant 0 : index
    %3 = vector.load %arg3[%c0_2, %c0_3, %c0_4] : memref<1x8x32xf32, #tpu.memory_space<vmem>>, vector<1x8x32xf32>
    %4 = vector.shape_cast %3 : vector<1x8x32xf32> to vector<8x32xf32>
    %5 = arith.truncf %4 : vector<8x32xf32> to vector<8x32xbf16>
    %cst = arith.constant 0.000000e+00 : f32
    %6 = vector.broadcast %cst : f32 to vector<8x32xf32>
    %c0_5 = arith.constant 0 : index
    %c0_6 = arith.constant 0 : index
    %7 = vector.load %arg13[%c0_5, %c0_6] : memref<8x32xf32, #tpu.memory_space<vmem>>, vector<8x32xf32>
    tpu.vector_store %arg13[%c0_5, %c0_6], %6 {strides = array<i32>} : memref<8x32xf32, #tpu.memory_space<vmem>>, vector<8x32xf32>,
    %c0_i32 = arith.constant 0 : i32
    %8 = arith.index_cast %c0_i32 : i32 to index
    %c0_7 = arith.constant 0 : index
    %c0_8 = arith.constant 0 : index
    %9 = vector.load %arg4[%8, %c0_7, %c0_8] : memref<4x32x8xbf16, #tpu.memory_space<vmem>>, vector<1x32x8xbf16>
    %10 = vector.shape_cast %9 : vector<1x32x8xbf16> to vector<32x8xbf16>
    %cst_9 = arith.constant dense<0.000000e+00> : vector<8x8xf32>
    %11 = tpu.matmul %2, %10, %cst_9 {dimension_numbers = #tpu.dot_dimension_numbers<[1], [0], [0], [1], [0, 0, 1, 1], [], []>} : vector<8x32xbf16>, vector<32x8xbf16>, vector<8x8xf32> -> vector<8x8xf32>
    %12 = arith.index_cast %c0_i32 : i32 to index
    %c0_10 = arith.constant 0 : index
    %c0_11 = arith.constant 0 : index
    %13 = vector.load %arg5[%12, %c0_10, %c0_11] : memref<4x32x8xbf16, #tpu.memory_space<vmem>>, vector<1x32x8xbf16>
    %14 = vector.shape_cast %13 : vector<1x32x8xbf16> to vector<32x8xbf16>
    %cst_12 = arith.constant dense<0.000000e+00> : vector<8x8xf32>
    %15 = tpu.matmul %5, %14, %cst_12 {dimension_numbers = #tpu.dot_dimension_numbers<[1], [0], [0], [1], [0, 0, 1, 1], [], []>} : vector<8x32xbf16>, vector<32x8xbf16>, vector<8x8xf32> -> vector<8x8xf32>
    %16 = arith.index_cast %c0_i32 : i32 to index
    %c0_13 = arith.constant 0 : index
    %c0_14 = arith.constant 0 : index
    %17 = vector.load %arg6[%16, %c0_13, %c0_14] : memref<4x32x8xbf16, #tpu.memory_space<vmem>>, vector<1x32x8xbf16>
    %18 = vector.shape_cast %17 : vector<1x32x8xbf16> to vector<32x8xbf16>
    %cst_15 = arith.constant dense<0.000000e+00> : vector<8x8xf32>
    %19 = tpu.matmul %5, %18, %cst_15 {dimension_numbers = #tpu.dot_dimension_numbers<[1], [0], [0], [1], [0, 0, 1, 1], [], []>} : vector<8x32xbf16>, vector<32x8xbf16>, vector<8x8xf32> -> vector<8x8xf32>
    %20 = arith.truncf %11 : vector<8x8xf32> to vector<8x8xbf16>
    %21 = arith.truncf %15 : vector<8x8xf32> to vector<8x8xbf16>
    %cst_16 = arith.constant dense<0.000000e+00> : vector<8x8xf32>
    %22 = tpu.matmul %20, %21, %cst_16 {dimension_numbers = #tpu.dot_dimension_numbers<[1], [1], [0], [0], [0, 0, 1, 0], [], []>} : vector<8x8xbf16>, vector<8x8xbf16>, vector<8x8xf32> -> vector<8x8xf32>
    %cst_17 = arith.constant dense<0xFF800000> : vector<8xf32>
    %23 = vector.multi_reduction <maximumf>, %22, %cst_17 [1] : vector<8x8xf32> to vector<8xf32>
    %24 = vector.shape_cast %23 : vector<8xf32> to vector<8x1xf32>
    %25 = vector.broadcast %24 : vector<8x1xf32> to vector<8x8xf32>
    %26 = arith.subf %22, %25 : vector<8x8xf32>
    %27 = math.exp %26 : vector<8x8xf32>
    %cst_18 = arith.constant dense<0.000000e+00> : vector<8xf32>
    %28 = vector.multi_reduction <add>, %27, %cst_18 [1] : vector<8x8xf32> to vector<8xf32>
    %29 = vector.shape_cast %28 : vector<8xf32> to vector<8x1xf32>
    %30 = tpu.reciprocal %29 {approx = true} : vector<8x1xf32> -> vector<8x1xf32>
    %31 = vector.broadcast %30 : vector<8x1xf32> to vector<8x8xf32>
    %32 = arith.mulf %27, %31 : vector<8x8xf32>
    %33 = arith.truncf %32 : vector<8x8xf32> to vector<8x8xbf16>
    %34 = arith.truncf %19 : vector<8x8xf32> to vector<8x8xbf16>
    %cst_19 = arith.constant dense<0.000000e+00> : vector<8x8xf32>
    %35 = tpu.matmul %33, %34, %cst_19 {dimension_numbers = #tpu.dot_dimension_numbers<[1], [0], [0], [1], [0, 0, 1, 1], [], []>} : vector<8x8xbf16>, vector<8x8xbf16>, vector<8x8xf32> -> vector<8x8xf32>
    %c0_20 = arith.constant 0 : index
    %c0_21 = arith.constant 0 : index
    %36 = vector.load %arg13[%c0_20, %c0_21] : memref<8x32xf32, #tpu.memory_space<vmem>>, vector<8x32xf32>
    %37 = arith.truncf %35 : vector<8x8xf32> to vector<8x8xbf16>
    %38 = arith.index_cast %c0_i32 : i32 to index
    %c0_22 = arith.constant 0 : index
    %c0_23 = arith.constant 0 : index
    %39 = vector.load %arg7[%38, %c0_22, %c0_23] : memref<4x8x32xbf16, #tpu.memory_space<vmem>>, vector<1x8x32xbf16>
    %40 = vector.shape_cast %39 : vector<1x8x32xbf16> to vector<8x32xbf16>
    %cst_24 = arith.constant dense<0.000000e+00> : vector<8x32xf32>
    %41 = tpu.matmul %37, %40, %cst_24 {dimension_numbers = #tpu.dot_dimension_numbers<[1], [0], [0], [1], [0, 0, 1, 1], [], []>} : vector<8x8xbf16>, vector<8x32xbf16>, vector<8x32xf32> -> vector<8x32xf32>
    %42 = arith.addf %36, %41 : vector<8x32xf32>
    %c0_25 = arith.constant 0 : index
    %c0_26 = arith.constant 0 : index
    %43 = vector.load %arg13[%c0_25, %c0_26] : memref<8x32xf32, #tpu.memory_space<vmem>>, vector<8x32xf32>
    tpu.vector_store %arg13[%c0_25, %c0_26], %42 {strides = array<i32>} : memref<8x32xf32, #tpu.memory_space<vmem>>, vector<8x32xf32>,
    %c1_i32 = arith.constant 1 : i32
    %44 = arith.index_cast %c1_i32 : i32 to index
    %c0_27 = arith.constant 0 : index
    %c0_28 = arith.constant 0 : index
    %45 = vector.load %arg4[%44, %c0_27, %c0_28] : memref<4x32x8xbf16, #tpu.memory_space<vmem>>, vector<1x32x8xbf16>
    %46 = vector.shape_cast %45 : vector<1x32x8xbf16> to vector<32x8xbf16>
    %cst_29 = arith.constant dense<0.000000e+00> : vector<8x8xf32>
    %47 = tpu.matmul %2, %46, %cst_29 {dimension_numbers = #tpu.dot_dimension_numbers<[1], [0], [0], [1], [0, 0, 1, 1], [], []>} : vector<8x32xbf16>, vector<32x8xbf16>, vector<8x8xf32> -> vector<8x8xf32>
    %48 = arith.index_cast %c1_i32 : i32 to index
    %c0_30 = arith.constant 0 : index
    %c0_31 = arith.constant 0 : index
    %49 = vector.load %arg5[%48, %c0_30, %c0_31] : memref<4x32x8xbf16, #tpu.memory_space<vmem>>, vector<1x32x8xbf16>
    %50 = vector.shape_cast %49 : vector<1x32x8xbf16> to vector<32x8xbf16>
    %cst_32 = arith.constant dense<0.000000e+00> : vector<8x8xf32>
    %51 = tpu.matmul %5, %50, %cst_32 {dimension_numbers = #tpu.dot_dimension_numbers<[1], [0], [0], [1], [0, 0, 1, 1], [], []>} : vector<8x32xbf16>, vector<32x8xbf16>, vector<8x8xf32> -> vector<8x8xf32>
    %52 = arith.index_cast %c1_i32 : i32 to index
    %c0_33 = arith.constant 0 : index
    %c0_34 = arith.constant 0 : index
    %53 = vector.load %arg6[%52, %c0_33, %c0_34] : memref<4x32x8xbf16, #tpu.memory_space<vmem>>, vector<1x32x8xbf16>
    %54 = vector.shape_cast %53 : vector<1x32x8xbf16> to vector<32x8xbf16>
    %cst_35 = arith.constant dense<0.000000e+00> : vector<8x8xf32>
    %55 = tpu.matmul %5, %54, %cst_35 {dimension_numbers = #tpu.dot_dimension_numbers<[1], [0], [0], [1], [0, 0, 1, 1], [], []>} : vector<8x32xbf16>, vector<32x8xbf16>, vector<8x8xf32> -> vector<8x8xf32>
    %56 = arith.truncf %47 : vector<8x8xf32> to vector<8x8xbf16>
    %57 = arith.truncf %51 : vector<8x8xf32> to vector<8x8xbf16>
    %cst_36 = arith.constant dense<0.000000e+00> : vector<8x8xf32>
    %58 = tpu.matmul %56, %57, %cst_36 {dimension_numbers = #tpu.dot_dimension_numbers<[1], [1], [0], [0], [0, 0, 1, 0], [], []>} : vector<8x8xbf16>, vector<8x8xbf16>, vector<8x8xf32> -> vector<8x8xf32>
    %cst_37 = arith.constant dense<0xFF800000> : vector<8xf32>
    %59 = vector.multi_reduction <maximumf>, %58, %cst_37 [1] : vector<8x8xf32> to vector<8xf32>
    %60 = vector.shape_cast %59 : vector<8xf32> to vector<8x1xf32>
    %61 = vector.broadcast %60 : vector<8x1xf32> to vector<8x8xf32>
    %62 = arith.subf %58, %61 : vector<8x8xf32>
    %63 = math.exp %62 : vector<8x8xf32>
    %cst_38 = arith.constant dense<0.000000e+00> : vector<8xf32>
    %64 = vector.multi_reduction <add>, %63, %cst_38 [1] : vector<8x8xf32> to vector<8xf32>
    %65 = vector.shape_cast %64 : vector<8xf32> to vector<8x1xf32>
    %66 = tpu.reciprocal %65 {approx = true} : vector<8x1xf32> -> vector<8x1xf32>
    %67 = vector.broadcast %66 : vector<8x1xf32> to vector<8x8xf32>
    %68 = arith.mulf %63, %67 : vector<8x8xf32>
    %69 = arith.truncf %68 : vector<8x8xf32> to vector<8x8xbf16>
    %70 = arith.truncf %55 : vector<8x8xf32> to vector<8x8xbf16>
    %cst_39 = arith.constant dense<0.000000e+00> : vector<8x8xf32>
    %71 = tpu.matmul %69, %70, %cst_39 {dimension_numbers = #tpu.dot_dimension_numbers<[1], [0], [0], [1], [0, 0, 1, 1], [], []>} : vector<8x8xbf16>, vector<8x8xbf16>, vector<8x8xf32> -> vector<8x8xf32>
    %c0_40 = arith.constant 0 : index
    %c0_41 = arith.constant 0 : index
    %72 = vector.load %arg13[%c0_40, %c0_41] : memref<8x32xf32, #tpu.memory_space<vmem>>, vector<8x32xf32>
    %73 = arith.truncf %71 : vector<8x8xf32> to vector<8x8xbf16>
    %74 = arith.index_cast %c1_i32 : i32 to index
    %c0_42 = arith.constant 0 : index
    %c0_43 = arith.constant 0 : index
    %75 = vector.load %arg7[%74, %c0_42, %c0_43] : memref<4x8x32xbf16, #tpu.memory_space<vmem>>, vector<1x8x32xbf16>
    %76 = vector.shape_cast %75 : vector<1x8x32xbf16> to vector<8x32xbf16>
    %cst_44 = arith.constant dense<0.000000e+00> : vector<8x32xf32>
    %77 = tpu.matmul %73, %76, %cst_44 {dimension_numbers = #tpu.dot_dimension_numbers<[1], [0], [0], [1], [0, 0, 1, 1], [], []>} : vector<8x8xbf16>, vector<8x32xbf16>, vector<8x32xf32> -> vector<8x32xf32>
    %78 = arith.addf %72, %77 : vector<8x32xf32>
    %c0_45 = arith.constant 0 : index
    %c0_46 = arith.constant 0 : index
    %79 = vector.load %arg13[%c0_45, %c0_46] : memref<8x32xf32, #tpu.memory_space<vmem>>, vector<8x32xf32>
    tpu.vector_store %arg13[%c0_45, %c0_46], %78 {strides = array<i32>} : memref<8x32xf32, #tpu.memory_space<vmem>>, vector<8x32xf32>,
    %c2_i32 = arith.constant 2 : i32
    %80 = arith.index_cast %c2_i32 : i32 to index
    %c0_47 = arith.constant 0 : index
    %c0_48 = arith.constant 0 : index
    %81 = vector.load %arg4[%80, %c0_47, %c0_48] : memref<4x32x8xbf16, #tpu.memory_space<vmem>>, vector<1x32x8xbf16>
    %82 = vector.shape_cast %81 : vector<1x32x8xbf16> to vector<32x8xbf16>
    %cst_49 = arith.constant dense<0.000000e+00> : vector<8x8xf32>
    %83 = tpu.matmul %2, %82, %cst_49 {dimension_numbers = #tpu.dot_dimension_numbers<[1], [0], [0], [1], [0, 0, 1, 1], [], []>} : vector<8x32xbf16>, vector<32x8xbf16>, vector<8x8xf32> -> vector<8x8xf32>
    %84 = arith.index_cast %c2_i32 : i32 to index
    %c0_50 = arith.constant 0 : index
    %c0_51 = arith.constant 0 : index
    %85 = vector.load %arg5[%84, %c0_50, %c0_51] : memref<4x32x8xbf16, #tpu.memory_space<vmem>>, vector<1x32x8xbf16>
    %86 = vector.shape_cast %85 : vector<1x32x8xbf16> to vector<32x8xbf16>
    %cst_52 = arith.constant dense<0.000000e+00> : vector<8x8xf32>
    %87 = tpu.matmul %5, %86, %cst_52 {dimension_numbers = #tpu.dot_dimension_numbers<[1], [0], [0], [1], [0, 0, 1, 1], [], []>} : vector<8x32xbf16>, vector<32x8xbf16>, vector<8x8xf32> -> vector<8x8xf32>
    %88 = arith.index_cast %c2_i32 : i32 to index
    %c0_53 = arith.constant 0 : index
    %c0_54 = arith.constant 0 : index
    %89 = vector.load %arg6[%88, %c0_53, %c0_54] : memref<4x32x8xbf16, #tpu.memory_space<vmem>>, vector<1x32x8xbf16>
    %90 = vector.shape_cast %89 : vector<1x32x8xbf16> to vector<32x8xbf16>
    %cst_55 = arith.constant dense<0.000000e+00> : vector<8x8xf32>
    %91 = tpu.matmul %5, %90, %cst_55 {dimension_numbers = #tpu.dot_dimension_numbers<[1], [0], [0], [1], [0, 0, 1, 1], [], []>} : vector<8x32xbf16>, vector<32x8xbf16>, vector<8x8xf32> -> vector<8x8xf32>
    %92 = arith.truncf %83 : vector<8x8xf32> to vector<8x8xbf16>
    %93 = arith.truncf %87 : vector<8x8xf32> to vector<8x8xbf16>
    %cst_56 = arith.constant dense<0.000000e+00> : vector<8x8xf32>
    %94 = tpu.matmul %92, %93, %cst_56 {dimension_numbers = #tpu.dot_dimension_numbers<[1], [1], [0], [0], [0, 0, 1, 0], [], []>} : vector<8x8xbf16>, vector<8x8xbf16>, vector<8x8xf32> -> vector<8x8xf32>
    %cst_57 = arith.constant dense<0xFF800000> : vector<8xf32>
    %95 = vector.multi_reduction <maximumf>, %94, %cst_57 [1] : vector<8x8xf32> to vector<8xf32>
    %96 = vector.shape_cast %95 : vector<8xf32> to vector<8x1xf32>
    %97 = vector.broadcast %96 : vector<8x1xf32> to vector<8x8xf32>
    %98 = arith.subf %94, %97 : vector<8x8xf32>
    %99 = math.exp %98 : vector<8x8xf32>
    %cst_58 = arith.constant dense<0.000000e+00> : vector<8xf32>
    %100 = vector.multi_reduction <add>, %99, %cst_58 [1] : vector<8x8xf32> to vector<8xf32>
    %101 = vector.shape_cast %100 : vector<8xf32> to vector<8x1xf32>
    %102 = tpu.reciprocal %101 {approx = true} : vector<8x1xf32> -> vector<8x1xf32>
    %103 = vector.broadcast %102 : vector<8x1xf32> to vector<8x8xf32>
    %104 = arith.mulf %99, %103 : vector<8x8xf32>
    %105 = arith.truncf %104 : vector<8x8xf32> to vector<8x8xbf16>
    %106 = arith.truncf %91 : vector<8x8xf32> to vector<8x8xbf16>
    %cst_59 = arith.constant dense<0.000000e+00> : vector<8x8xf32>
    %107 = tpu.matmul %105, %106, %cst_59 {dimension_numbers = #tpu.dot_dimension_numbers<[1], [0], [0], [1], [0, 0, 1, 1], [], []>} : vector<8x8xbf16>, vector<8x8xbf16>, vector<8x8xf32> -> vector<8x8xf32>
    %c0_60 = arith.constant 0 : index
    %c0_61 = arith.constant 0 : index
    %108 = vector.load %arg13[%c0_60, %c0_61] : memref<8x32xf32, #tpu.memory_space<vmem>>, vector<8x32xf32>
    %109 = arith.truncf %107 : vector<8x8xf32> to vector<8x8xbf16>
    %110 = arith.index_cast %c2_i32 : i32 to index
    %c0_62 = arith.constant 0 : index
    %c0_63 = arith.constant 0 : index
    %111 = vector.load %arg7[%110, %c0_62, %c0_63] : memref<4x8x32xbf16, #tpu.memory_space<vmem>>, vector<1x8x32xbf16>
    %112 = vector.shape_cast %111 : vector<1x8x32xbf16> to vector<8x32xbf16>
    %cst_64 = arith.constant dense<0.000000e+00> : vector<8x32xf32>
    %113 = tpu.matmul %109, %112, %cst_64 {dimension_numbers = #tpu.dot_dimension_numbers<[1], [0], [0], [1], [0, 0, 1, 1], [], []>} : vector<8x8xbf16>, vector<8x32xbf16>, vector<8x32xf32> -> vector<8x32xf32>
    %114 = arith.addf %108, %113 : vector<8x32xf32>
    %c0_65 = arith.constant 0 : index
    %c0_66 = arith.constant 0 : index
    %115 = vector.load %arg13[%c0_65, %c0_66] : memref<8x32xf32, #tpu.memory_space<vmem>>, vector<8x32xf32>
    tpu.vector_store %arg13[%c0_65, %c0_66], %114 {strides = array<i32>} : memref<8x32xf32, #tpu.memory_space<vmem>>, vector<8x32xf32>,
    %c3_i32 = arith.constant 3 : i32
    %116 = arith.index_cast %c3_i32 : i32 to index
    %c0_67 = arith.constant 0 : index
    %c0_68 = arith.constant 0 : index
    %117 = vector.load %arg4[%116, %c0_67, %c0_68] : memref<4x32x8xbf16, #tpu.memory_space<vmem>>, vector<1x32x8xbf16>
    %118 = vector.shape_cast %117 : vector<1x32x8xbf16> to vector<32x8xbf16>
    %cst_69 = arith.constant dense<0.000000e+00> : vector<8x8xf32>
    %119 = tpu.matmul %2, %118, %cst_69 {dimension_numbers = #tpu.dot_dimension_numbers<[1], [0], [0], [1], [0, 0, 1, 1], [], []>} : vector<8x32xbf16>, vector<32x8xbf16>, vector<8x8xf32> -> vector<8x8xf32>
    %120 = arith.index_cast %c3_i32 : i32 to index
    %c0_70 = arith.constant 0 : index
    %c0_71 = arith.constant 0 : index
    %121 = vector.load %arg5[%120, %c0_70, %c0_71] : memref<4x32x8xbf16, #tpu.memory_space<vmem>>, vector<1x32x8xbf16>
    %122 = vector.shape_cast %121 : vector<1x32x8xbf16> to vector<32x8xbf16>
    %cst_72 = arith.constant dense<0.000000e+00> : vector<8x8xf32>
    %123 = tpu.matmul %5, %122, %cst_72 {dimension_numbers = #tpu.dot_dimension_numbers<[1], [0], [0], [1], [0, 0, 1, 1], [], []>} : vector<8x32xbf16>, vector<32x8xbf16>, vector<8x8xf32> -> vector<8x8xf32>
    %124 = arith.index_cast %c3_i32 : i32 to index
    %c0_73 = arith.constant 0 : index
    %c0_74 = arith.constant 0 : index
    %125 = vector.load %arg6[%124, %c0_73, %c0_74] : memref<4x32x8xbf16, #tpu.memory_space<vmem>>, vector<1x32x8xbf16>
    %126 = vector.shape_cast %125 : vector<1x32x8xbf16> to vector<32x8xbf16>
    %cst_75 = arith.constant dense<0.000000e+00> : vector<8x8xf32>
    %127 = tpu.matmul %5, %126, %cst_75 {dimension_numbers = #tpu.dot_dimension_numbers<[1], [0], [0], [1], [0, 0, 1, 1], [], []>} : vector<8x32xbf16>, vector<32x8xbf16>, vector<8x8xf32> -> vector<8x8xf32>
    %128 = arith.truncf %119 : vector<8x8xf32> to vector<8x8xbf16>
    %129 = arith.truncf %123 : vector<8x8xf32> to vector<8x8xbf16>
    %cst_76 = arith.constant dense<0.000000e+00> : vector<8x8xf32>
    %130 = tpu.matmul %128, %129, %cst_76 {dimension_numbers = #tpu.dot_dimension_numbers<[1], [1], [0], [0], [0, 0, 1, 0], [], []>} : vector<8x8xbf16>, vector<8x8xbf16>, vector<8x8xf32> -> vector<8x8xf32>
    %cst_77 = arith.constant dense<0xFF800000> : vector<8xf32>
    %131 = vector.multi_reduction <maximumf>, %130, %cst_77 [1] : vector<8x8xf32> to vector<8xf32>
    %132 = vector.shape_cast %131 : vector<8xf32> to vector<8x1xf32>
    %133 = vector.broadcast %132 : vector<8x1xf32> to vector<8x8xf32>
    %134 = arith.subf %130, %133 : vector<8x8xf32>
    %135 = math.exp %134 : vector<8x8xf32>
    %cst_78 = arith.constant dense<0.000000e+00> : vector<8xf32>
    %136 = vector.multi_reduction <add>, %135, %cst_78 [1] : vector<8x8xf32> to vector<8xf32>
    %137 = vector.shape_cast %136 : vector<8xf32> to vector<8x1xf32>
    %138 = tpu.reciprocal %137 {approx = true} : vector<8x1xf32> -> vector<8x1xf32>
    %139 = vector.broadcast %138 : vector<8x1xf32> to vector<8x8xf32>
    %140 = arith.mulf %135, %139 : vector<8x8xf32>
    %141 = arith.truncf %140 : vector<8x8xf32> to vector<8x8xbf16>
    %142 = arith.truncf %127 : vector<8x8xf32> to vector<8x8xbf16>
    %cst_79 = arith.constant dense<0.000000e+00> : vector<8x8xf32>
    %143 = tpu.matmul %141, %142, %cst_79 {dimension_numbers = #tpu.dot_dimension_numbers<[1], [0], [0], [1], [0, 0, 1, 1], [], []>} : vector<8x8xbf16>, vector<8x8xbf16>, vector<8x8xf32> -> vector<8x8xf32>
    %c0_80 = arith.constant 0 : index
    %c0_81 = arith.constant 0 : index
    %144 = vector.load %arg13[%c0_80, %c0_81] : memref<8x32xf32, #tpu.memory_space<vmem>>, vector<8x32xf32>
    %145 = arith.truncf %143 : vector<8x8xf32> to vector<8x8xbf16>
    %146 = arith.index_cast %c3_i32 : i32 to index
    %c0_82 = arith.constant 0 : index
    %c0_83 = arith.constant 0 : index
    %147 = vector.load %arg7[%146, %c0_82, %c0_83] : memref<4x8x32xbf16, #tpu.memory_space<vmem>>, vector<1x8x32xbf16>
    %148 = vector.shape_cast %147 : vector<1x8x32xbf16> to vector<8x32xbf16>
    %cst_84 = arith.constant dense<0.000000e+00> : vector<8x32xf32>
    %149 = tpu.matmul %145, %148, %cst_84 {dimension_numbers = #tpu.dot_dimension_numbers<[1], [0], [0], [1], [0, 0, 1, 1], [], []>} : vector<8x8xbf16>, vector<8x32xbf16>, vector<8x32xf32> -> vector<8x32xf32>
    %150 = arith.addf %144, %149 : vector<8x32xf32>
    %c0_85 = arith.constant 0 : index
    %c0_86 = arith.constant 0 : index
    %151 = vector.load %arg13[%c0_85, %c0_86] : memref<8x32xf32, #tpu.memory_space<vmem>>, vector<8x32xf32>
    tpu.vector_store %arg13[%c0_85, %c0_86], %150 {strides = array<i32>} : memref<8x32xf32, #tpu.memory_space<vmem>>, vector<8x32xf32>,
    %c4_i32 = arith.constant 4 : i32
    %c0_87 = arith.constant 0 : index
    %c0_88 = arith.constant 0 : index
    %152 = vector.load %arg11[%c0_87, %c0_88] : memref<8x32xf32, #tpu.memory_space<vmem>>, vector<8x32xf32>
    %153 = vector.extract_strided_slice %152 {offsets = [0, 0], sizes = [1, 32], strides = [1, 1]} : vector<8x32xf32> to vector<1x32xf32>
    %154 = vector.extract_strided_slice %152 {offsets = [1, 0], sizes = [1, 32], strides = [1, 1]} : vector<8x32xf32> to vector<1x32xf32>
    %155 = vector.extract_strided_slice %152 {offsets = [2, 0], sizes = [1, 32], strides = [1, 1]} : vector<8x32xf32> to vector<1x32xf32>
    %156 = vector.extract_strided_slice %152 {offsets = [3, 0], sizes = [1, 32], strides = [1, 1]} : vector<8x32xf32> to vector<1x32xf32>
    %157 = vector.extract_strided_slice %152 {offsets = [4, 0], sizes = [1, 32], strides = [1, 1]} : vector<8x32xf32> to vector<1x32xf32>
    %158 = vector.extract_strided_slice %152 {offsets = [5, 0], sizes = [1, 32], strides = [1, 1]} : vector<8x32xf32> to vector<1x32xf32>
    %c0_89 = arith.constant 0 : index
    %c0_90 = arith.constant 0 : index
    %159 = vector.load %arg13[%c0_89, %c0_90] : memref<8x32xf32, #tpu.memory_space<vmem>>, vector<8x32xf32>
    %160 = vector.broadcast %153 : vector<1x32xf32> to vector<8x32xf32>
    %161 = arith.addf %159, %160 : vector<8x32xf32>
    %162 = arith.addf %1, %161 : vector<8x32xf32>
    %cst_91 = arith.constant dense<0.000000e+00> : vector<8xf32>
    %163 = vector.multi_reduction <add>, %162, %cst_91 [1] : vector<8x32xf32> to vector<8xf32>
    %164 = vector.shape_cast %163 : vector<8xf32> to vector<8x1xf32>
    %cst_92 = arith.constant 3.200000e+01 : f32
    %165 = vector.broadcast %cst_92 : f32 to vector<8x1xf32>
    %166 = arith.divf %164, %165 : vector<8x1xf32>
    %167 = vector.broadcast %166 : vector<8x1xf32> to vector<8x32xf32>
    %168 = arith.subf %162, %167 : vector<8x32xf32>
    %169 = arith.mulf %168, %168 : vector<8x32xf32>
    %cst_93 = arith.constant dense<0.000000e+00> : vector<8xf32>
    %170 = vector.multi_reduction <add>, %169, %cst_93 [1] : vector<8x32xf32> to vector<8xf32>
    %171 = vector.shape_cast %170 : vector<8xf32> to vector<8x1xf32>
    %cst_94 = arith.constant 3.200000e+01 : f32
    %172 = vector.broadcast %cst_94 : f32 to vector<8x1xf32>
    %173 = arith.divf %171, %172 : vector<8x1xf32>
    %174 = vector.broadcast %166 : vector<8x1xf32> to vector<8x32xf32>
    %175 = arith.subf %162, %174 : vector<8x32xf32>
    %cst_95 = arith.constant 9.99999974E-6 : f32
    %176 = vector.broadcast %cst_95 : f32 to vector<8x1xf32>
    %177 = arith.addf %173, %176 : vector<8x1xf32>
    %178 = math.rsqrt %177 : vector<8x1xf32>
    %179 = vector.broadcast %178 : vector<8x1xf32> to vector<8x32xf32>
    %180 = arith.mulf %175, %179 : vector<8x32xf32>
    %181 = vector.broadcast %155 : vector<1x32xf32> to vector<8x32xf32>
    %182 = arith.mulf %180, %181 : vector<8x32xf32>
    %183 = vector.broadcast %156 : vector<1x32xf32> to vector<8x32xf32>
    %184 = arith.addf %182, %183 : vector<8x32xf32>
    %185 = arith.truncf %184 : vector<8x32xf32> to vector<8x32xbf16>
    %c0_96 = arith.constant 0 : index
    %c0_97 = arith.constant 0 : index
    %186 = vector.load %arg8[%c0_96, %c0_97] : memref<32x64xbf16, #tpu.memory_space<vmem>>, vector<32x64xbf16>
    %cst_98 = arith.constant dense<0.000000e+00> : vector<8x64xf32>
    %187 = tpu.matmul %185, %186, %cst_98 {dimension_numbers = #tpu.dot_dimension_numbers<[1], [0], [0], [1], [0, 0, 1, 1], [], []>} : vector<8x32xbf16>, vector<32x64xbf16>, vector<8x64xf32> -> vector<8x64xf32>
    %c0_99 = arith.constant 0 : index
    %c0_100 = arith.constant 0 : index
    %188 = vector.load %arg10[%c0_99, %c0_100] : memref<1x64xf32, #tpu.memory_space<vmem>>, vector<1x64xf32>
    %189 = vector.broadcast %188 : vector<1x64xf32> to vector<8x64xf32>
    %190 = arith.addf %187, %189 : vector<8x64xf32>
    %cst_101 = arith.constant 5.000000e-01 : f32
    %191 = vector.broadcast %cst_101 : f32 to vector<8x64xf32>
    %192 = arith.mulf %191, %190 : vector<8x64xf32>
    %cst_102 = arith.constant 0.707106769 : f32
    %193 = vector.broadcast %cst_102 : f32 to vector<8x64xf32>
    %194 = arith.mulf %190, %193 : vector<8x64xf32>
    %195 = math.absf %194 : vector<8x64xf32>
    %cst_103 = arith.constant 0.327591091 : f32
    %196 = vector.broadcast %cst_103 : f32 to vector<8x64xf32>
    %197 = arith.mulf %196, %195 : vector<8x64xf32>
    %cst_104 = arith.constant 1.000000e+00 : f32
    %198 = vector.broadcast %cst_104 : f32 to vector<8x64xf32>
    %199 = arith.addf %198, %197 : vector<8x64xf32>
    %cst_105 = arith.constant 1.000000e+00 : f32
    %200 = vector.broadcast %cst_105 : f32 to vector<8x64xf32>
    %201 = arith.divf %200, %199 : vector<8x64xf32>
    %cst_106 = arith.constant 1.06140542 : f32
    %202 = vector.broadcast %cst_106 : f32 to vector<8x64xf32>
    %203 = arith.mulf %202, %201 : vector<8x64xf32>
    %cst_107 = arith.constant -1.45315206 : f32
    %204 = vector.broadcast %cst_107 : f32 to vector<8x64xf32>
    %205 = arith.addf %203, %204 : vector<8x64xf32>
    %206 = arith.mulf %205, %201 : vector<8x64xf32>
    %cst_108 = arith.constant 1.42141378 : f32
    %207 = vector.broadcast %cst_108 : f32 to vector<8x64xf32>
    %208 = arith.addf %206, %207 : vector<8x64xf32>
    %209 = arith.mulf %208, %201 : vector<8x64xf32>
    %cst_109 = arith.constant -0.284496725 : f32
    %210 = vector.broadcast %cst_109 : f32 to vector<8x64xf32>
    %211 = arith.addf %209, %210 : vector<8x64xf32>
    %212 = arith.mulf %211, %201 : vector<8x64xf32>
    %cst_110 = arith.constant 0.254829586 : f32
    %213 = vector.broadcast %cst_110 : f32 to vector<8x64xf32>
    %214 = arith.addf %212, %213 : vector<8x64xf32>
    %215 = arith.mulf %214, %201 : vector<8x64xf32>
    %cst_111 = arith.constant 0.000000e+00 : f32
    %216 = vector.broadcast %cst_111 : f32 to vector<8x64xf32>
    %217 = arith.subf %216, %195 : vector<8x64xf32>
    %218 = arith.mulf %217, %195 : vector<8x64xf32>
    %219 = math.exp %218 : vector<8x64xf32>
    %220 = arith.mulf %215, %219 : vector<8x64xf32>
    %cst_112 = arith.constant 1.000000e+00 : f32
    %221 = vector.broadcast %cst_112 : f32 to vector<8x64xf32>
    %222 = arith.subf %221, %220 : vector<8x64xf32>
    %cst_113 = arith.constant 0.000000e+00 : f32
    %223 = vector.broadcast %cst_113 : f32 to vector<8x64xf32>
    %224 = arith.cmpf oge, %194, %223 : vector<8x64xf32>
    %cst_114 = arith.constant 0.000000e+00 : f32
    %225 = vector.broadcast %cst_114 : f32 to vector<8x64xf32>
    %226 = arith.subf %225, %222 : vector<8x64xf32>
    %227 = arith.select %224, %222, %226 : vector<8x64xi1>, vector<8x64xf32>
    %cst_115 = arith.constant 1.000000e+00 : f32
    %228 = vector.broadcast %cst_115 : f32 to vector<8x64xf32>
    %229 = arith.addf %228, %227 : vector<8x64xf32>
    %230 = arith.mulf %192, %229 : vector<8x64xf32>
    %231 = arith.truncf %230 : vector<8x64xf32> to vector<8x64xbf16>
    %c0_116 = arith.constant 0 : index
    %c0_117 = arith.constant 0 : index
    %232 = vector.load %arg9[%c0_116, %c0_117] : memref<64x32xbf16, #tpu.memory_space<vmem>>, vector<64x32xbf16>
    %cst_118 = arith.constant dense<0.000000e+00> : vector<8x32xf32>
    %233 = tpu.matmul %231, %232, %cst_118 {dimension_numbers = #tpu.dot_dimension_numbers<[1], [0], [0], [1], [0, 0, 1, 1], [], []>} : vector<8x64xbf16>, vector<64x32xbf16>, vector<8x32xf32> -> vector<8x32xf32>
    %234 = vector.broadcast %154 : vector<1x32xf32> to vector<8x32xf32>
    %235 = arith.addf %233, %234 : vector<8x32xf32>
    %236 = arith.addf %184, %235 : vector<8x32xf32>
    %cst_119 = arith.constant dense<0.000000e+00> : vector<8xf32>
    %237 = vector.multi_reduction <add>, %236, %cst_119 [1] : vector<8x32xf32> to vector<8xf32>
    %238 = vector.shape_cast %237 : vector<8xf32> to vector<8x1xf32>
    %cst_120 = arith.constant 3.200000e+01 : f32
    %239 = vector.broadcast %cst_120 : f32 to vector<8x1xf32>
    %240 = arith.divf %238, %239 : vector<8x1xf32>
    %241 = vector.broadcast %240 : vector<8x1xf32> to vector<8x32xf32>
    %242 = arith.subf %236, %241 : vector<8x32xf32>
    %243 = arith.mulf %242, %242 : vector<8x32xf32>
    %cst_121 = arith.constant dense<0.000000e+00> : vector<8xf32>
    %244 = vector.multi_reduction <add>, %243, %cst_121 [1] : vector<8x32xf32> to vector<8xf32>
    %245 = vector.shape_cast %244 : vector<8xf32> to vector<8x1xf32>
    %cst_122 = arith.constant 3.200000e+01 : f32
    %246 = vector.broadcast %cst_122 : f32 to vector<8x1xf32>
    %247 = arith.divf %245, %246 : vector<8x1xf32>
    %248 = vector.broadcast %240 : vector<8x1xf32> to vector<8x32xf32>
    %249 = arith.subf %236, %248 : vector<8x32xf32>
    %cst_123 = arith.constant 9.99999974E-6 : f32
    %250 = vector.broadcast %cst_123 : f32 to vector<8x1xf32>
    %251 = arith.addf %247, %250 : vector<8x1xf32>
    %252 = math.rsqrt %251 : vector<8x1xf32>
    %253 = vector.broadcast %252 : vector<8x1xf32> to vector<8x32xf32>
    %254 = arith.mulf %249, %253 : vector<8x32xf32>
    %255 = vector.broadcast %157 : vector<1x32xf32> to vector<8x32xf32>
    %256 = arith.mulf %254, %255 : vector<8x32xf32>
    %257 = vector.broadcast %158 : vector<1x32xf32> to vector<8x32xf32>
    %258 = arith.addf %256, %257 : vector<8x32xf32>
    %c0_124 = arith.constant 0 : index
    %c0_125 = arith.constant 0 : index
    %c0_126 = arith.constant 0 : index
    %259 = vector.load %arg12[%c0_124, %c0_125, %c0_126] : memref<1x8x32xf32, #tpu.memory_space<vmem>>, vector<1x8x32xf32>
    %260 = vector.shape_cast %259 : vector<1x8x32xf32> to vector<8x32xf32>
    %261 = vector.shape_cast %258 : vector<8x32xf32> to vector<1x8x32xf32>
    tpu.vector_store %arg12[%c0_124, %c0_125, %c0_126], %261 {strides = array<i32>} : memref<1x8x32xf32, #tpu.memory_space<vmem>>, vector<1x8x32xf32>,
    return
  }
  func.func @transform_0(%arg0: i32, %arg1: i32) -> (i32, i32, i32) {
    %c0_i32 = arith.constant 0 : i32
    %c0_i32_0 = arith.constant 0 : i32
    return %arg0, %arg1, %c0_i32 : i32, i32, i32
  }
  func.func @transform_1(%arg0: i32, %arg1: i32) -> (i32, i32, i32) {
    %c0_i32 = arith.constant 0 : i32
    %c0_i32_0 = arith.constant 0 : i32
    %c0_i32_1 = arith.constant 0 : i32
    return %arg0, %c0_i32, %c0_i32_0 : i32, i32, i32
  }
  func.func @transform_2(%arg0: i32, %arg1: i32) -> (i32, i32, i32) {
    %c0_i32 = arith.constant 0 : i32
    %c0_i32_0 = arith.constant 0 : i32
    %c0_i32_1 = arith.constant 0 : i32
    %c0_i32_2 = arith.constant 0 : i32
    return %c0_i32, %c0_i32_0, %c0_i32_1 : i32, i32, i32
  }
  func.func @transform_3(%arg0: i32, %arg1: i32) -> (i32, i32, i32) {
    %c0_i32 = arith.constant 0 : i32
    %c0_i32_0 = arith.constant 0 : i32
    %c0_i32_1 = arith.constant 0 : i32
    %c0_i32_2 = arith.constant 0 : i32
    return %c0_i32, %c0_i32_0, %c0_i32_1 : i32, i32, i32
  }
  func.func @transform_4(%arg0: i32, %arg1: i32) -> (i32, i32, i32) {
    %c0_i32 = arith.constant 0 : i32
    %c0_i32_0 = arith.constant 0 : i32
    %c0_i32_1 = arith.constant 0 : i32
    %c0_i32_2 = arith.constant 0 : i32
    return %c0_i32, %c0_i32_0, %c0_i32_1 : i32, i32, i32
  }
  func.func @transform_5(%arg0: i32, %arg1: i32) -> (i32, i32, i32) {
    %c0_i32 = arith.constant 0 : i32
    %c0_i32_0 = arith.constant 0 : i32
    %c0_i32_1 = arith.constant 0 : i32
    %c0_i32_2 = arith.constant 0 : i32
    return %c0_i32, %c0_i32_0, %c0_i32_1 : i32, i32, i32
  }
  func.func @transform_6(%arg0: i32, %arg1: i32) -> (i32, i32) {
    %c0_i32 = arith.constant 0 : i32
    %c0_i32_0 = arith.constant 0 : i32
    %c0_i32_1 = arith.constant 0 : i32
    return %c0_i32, %c0_i32_0 : i32, i32
  }
  func.func @transform_7(%arg0: i32, %arg1: i32) -> (i32, i32) {
    %c0_i32 = arith.constant 0 : i32
    %c0_i32_0 = arith.constant 0 : i32
    %c0_i32_1 = arith.constant 0 : i32
    return %c0_i32, %c0_i32_0 : i32, i32
  }
  func.func @transform_8(%arg0: i32, %arg1: i32) -> (i32, i32) {
    %c0_i32 = arith.constant 0 : i32
    %c0_i32_0 = arith.constant 0 : i32
    %c0_i32_1 = arith.constant 0 : i32
    return %c0_i32, %c0_i32_0 : i32, i32
  }
  func.func @transform_9(%arg0: i32, %arg1: i32) -> (i32, i32) {
    %c0_i32 = arith.constant 0 : i32
    %c0_i32_0 = arith.constant 0 : i32
    %c0_i32_1 = arith.constant 0 : i32
    return %c0_i32, %c0_i32_0 : i32, i32
  }
  func.func @transform_10(%arg0: i32, %arg1: i32) -> (i32, i32, i32) {
    %c0_i32 = arith.constant 0 : i32
    %c0_i32_0 = arith.constant 0 : i32
    return %arg0, %arg1, %c0_i32 : i32, i32, i32
  }
}

</mosaic_0001>

<llo_original>
// kernel: tpu_custom_call.1
$region0: #{tpu_custom_call.1}
  #allocation0 [shape = 'u32[]', space=smem, size = 0x4, offset = 0x4, fixed_abs, tag = 'smem constant byte address 0x4 - core index']
  #allocation1 [shape = 'u32[144,128]{1,0:T(1,128)}', space=vmem, size = 0x12000, scoped, tag = 'internal scratch']
  #allocation2 [shape = 'f32[8,32]{1,0:T(8,128)}', space=vmem, size = 0x1000, scoped, tag = 'scratch operand']
  %s0 = inlined_call_operand.vmem [shape: f32[2,8,32], index: 0, kind: input, shape index: {}]
  %s1 = inlined_call_operand.vmem [shape: f32[2,8,32], index: 1, kind: input, shape index: {}]
  %s2 = inlined_call_operand.vmem [shape: bf16[4,32,8], index: 2, kind: input, shape index: {}]
  %s3 = inlined_call_operand.vmem [shape: bf16[4,32,8], index: 3, kind: input, shape index: {}]
  %s4 = inlined_call_operand.vmem [shape: bf16[4,32,8], index: 4, kind: input, shape index: {}]
  %s5 = inlined_call_operand.vmem [shape: bf16[4,8,32], index: 5, kind: input, shape index: {}]
  %s6 = inlined_call_operand.vmem [shape: bf16[32,64], index: 6, kind: input, shape index: {}]
  %s7 = inlined_call_operand.vmem [shape: bf16[64,32], index: 7, kind: input, shape index: {}]
  %s8 = inlined_call_operand.vmem [shape: f32[1,64], index: 8, kind: input, shape index: {}]
  %s9 = inlined_call_operand.vmem [shape: f32[8,32], index: 9, kind: input, shape index: {}]
  %s10 = inlined_call_operand.hbm [shape: f32[2,8,32], index: 10, kind: output, shape index: {}]
  %s11 = sld [smem:[#allocation0]]
  $region73: #{tpu_custom_call.1} parent=0
    _
  %s13 = ssub.s32 1, %s11
  %s14 = scalar_select 0, %s13, %s11
  $region1: #{tpu_custom_call.1} parent=0
    #allocation3 [shape = 'u8[8192]{0}', space=vmem, size = 0x2000, scoped, tag = 'output window, operand 0']
    #allocation4 [shape = 's32[2]{0}', space=sflag, size = 0x8, scoped, tag = 'scoped memory for tpu_custom_call.1']
    %15 = vsyncpa [#allocation4], 0
    %s16 = scalar_lea.sflag [#allocation4], 1
    %17 = vsyncpa %s16, 0
    loop: start=0, step=1, limit=4
    $region2: #{tpu_custom_call.1} parent=1 // loop_pre_header
      _
    $region3: #{tpu_custom_call.1} parent=1 // loop_header
      %s19 = sphi 0, %s23
      %p20 = scmp.ge.s32.totalorder %s19, 4
      %s26 = sphi 0, %s38
      %s27 = sphi 0, %s34
      %s28 = sphi 0, %s26
      %s29 = sphi 0, %s27
      %s30 = sphi 0, %s28
      %s31 = sphi 0, %s29
      %s43 = sphi 0, %s45
      %s46 = sphi 0, %s43
      %s47 = sphi 0, %s46
      %s63 = sphi 0, %s47
      %s69 = sphi 0, %s71
      %s72 = sphi 0, %s69
      %s73 = sphi 0, %s72
      %s89 = sphi 0, %s73
      %s93 = sphi 0, %s93
      %s95 = sphi 0, %s93
      %s96 = sphi 0, %s95
      %s110 = sphi 0, %s96
      %s114 = sphi 0, %s114
      %s116 = sphi 0, %s114
      %s117 = sphi 0, %s116
      %s131 = sphi 0, %s117
      %s135 = sphi 0, %s135
      %s137 = sphi 0, %s135
      %s138 = sphi 0, %s137
      %s152 = sphi 0, %s138
      %s156 = sphi 0, %s156
      %s158 = sphi 0, %s156
      %s159 = sphi 0, %s158
      %s173 = sphi 0, %s159
      %s177 = sphi 0, %s177
      %s179 = sphi 0, %s177
      %s180 = sphi 0, %s179
      %s194 = sphi 0, %s180
      %s198 = sphi 0, %s198
      %s200 = sphi 0, %s198
      %s201 = sphi 0, %s200
      %s215 = sphi 0, %s201
      %s219 = sphi 0, %s219
      %s221 = sphi 0, %s219
      %s222 = sphi 0, %s221
      %s236 = sphi 0, %s222
      %s240 = sphi 0, %s240
      %s242 = sphi 0, %s240
      %s243 = sphi 0, %s242
      %s257 = sphi 0, %s243
      %s265 = sphi 0, %s267
      %s268 = sphi 0, %s265
      %s269 = sphi 0, %s268
      %s285 = sphi 0, %s269
    $region4: #{tpu_custom_call.1} parent=1 // loop_header_branch
      %22 = sbr.rel (%p20) target = $region8
    $region5: #{tpu_custom_call.1} parent=1 // loop_body
      %s24 = ssub.s32 %s19, 1
      %s25 = ssub.s32 %s19, 2
      %s32 = sadd.s32 1, %s27
      %p33 = scmp.ge.s32.totalorder %s32, 1
      %s34 = scalar_select %p33, 0, %s32
      %s35 = sadd.s32 1, %s26
      %s36 = scalar_select %p33, %s35, %s26
      %p37 = scmp.ge.s32.totalorder %s36, 2
      %s38 = scalar_select %p37, 0, %s36
      %s39 = ssub.s32 %s26, %s38
      %s40 = ssub.s32 %s27, %s34
      %s41 = sor.u32 %s39, %s40
      %p42 = scmp.eq.s32.totalorder %s41, 0
      %s44 = sadd.s32 %s43, 1
      %s45 = scalar_select %p42, %s43, %s44
      %p48 = pneg %p42
      %p49 = scmp.eq.s32.totalorder %s19, 1
      %p50 = por %p48, %p49
      %p51 = scmp.ne.s32.totalorder %s43, %s46
      %p52 = scmp.eq.s32.totalorder %s19, 0
      %p53 = por %p51, %p52
      %p54 = scmp.ne.s32.totalorder %s43, %s46
      %p55 = scmp.eq.s32.totalorder %s24, 1
      %p56 = por %p54, %p55
      %p57 = scmp.ne.s32.totalorder %s46, %s47
      %p58 = scmp.eq.s32.totalorder %s24, 0
      %p59 = por %p57, %p58
      %p60 = scmp.ne.s32.totalorder %s46, %s47
      %p61 = scmp.eq.s32.totalorder %s25, 1
      %p62 = por %p60, %p61
      %p64 = scmp.ne.s32.totalorder %s47, %s63
      %p65 = scmp.eq.s32.totalorder %s25, 0
      %p66 = por %p64, %p65
      %s67 = ssub.s32 %s26, %s38
      %p68 = scmp.eq.s32.totalorder %s67, 0
      %s70 = sadd.s32 %s69, 1
      %s71 = scalar_select %p68, %s69, %s70
      %p74 = pneg %p68
      %p75 = scmp.eq.s32.totalorder %s19, 1
      %p76 = por %p74, %p75
      %p77 = scmp.ne.s32.totalorder %s69, %s72
      %p78 = scmp.eq.s32.totalorder %s19, 0
      %p79 = por %p77, %p78
      %p80 = scmp.ne.s32.totalorder %s69, %s72
      %p81 = scmp.eq.s32.totalorder %s24, 1
      %p82 = por %p80, %p81
      %p83 = scmp.ne.s32.totalorder %s72, %s73
      %p84 = scmp.eq.s32.totalorder %s24, 0
      %p85 = por %p83, %p84
      %p86 = scmp.ne.s32.totalorder %s72, %s73
      %p87 = scmp.eq.s32.totalorder %s25, 1
      %p88 = por %p86, %p87
      %p90 = scmp.ne.s32.totalorder %s73, %s89
      %p91 = scmp.eq.s32.totalorder %s25, 0
      %p92 = por %p90, %p91
      %s94 = sadd.s32 %s93, 1
      %p97 = scmp.eq.s32.totalorder %s19, 1
      %p98 = scmp.ne.s32.totalorder %s93, %s95
      %p99 = scmp.eq.s32.totalorder %s19, 0
      %p100 = por %p98, %p99
      %p101 = scmp.ne.s32.totalorder %s93, %s95
      %p102 = scmp.eq.s32.totalorder %s24, 1
      %p103 = por %p101, %p102
      %p104 = scmp.ne.s32.totalorder %s95, %s96
      %p105 = scmp.eq.s32.totalorder %s24, 0
      %p106 = por %p104, %p105
      %p107 = scmp.ne.s32.totalorder %s95, %s96
      %p108 = scmp.eq.s32.totalorder %s25, 1
      %p109 = por %p107, %p108
      %p111 = scmp.ne.s32.totalorder %s96, %s110
      %p112 = scmp.eq.s32.totalorder %s25, 0
      %p113 = por %p111, %p112
      %s115 = sadd.s32 %s114, 1
      %p118 = scmp.eq.s32.totalorder %s19, 1
      %p119 = scmp.ne.s32.totalorder %s114, %s116
      %p120 = scmp.eq.s32.totalorder %s19, 0
      %p121 = por %p119, %p120
      %p122 = scmp.ne.s32.totalorder %s114, %s116
      %p123 = scmp.eq.s32.totalorder %s24, 1
      %p124 = por %p122, %p123
      %p125 = scmp.ne.s32.totalorder %s116, %s117
      %p126 = scmp.eq.s32.totalorder %s24, 0
      %p127 = por %p125, %p126
      %p128 = scmp.ne.s32.totalorder %s116, %s117
      %p129 = scmp.eq.s32.totalorder %s25, 1
      %p130 = por %p128, %p129
      %p132 = scmp.ne.s32.totalorder %s117, %s131
      %p133 = scmp.eq.s32.totalorder %s25, 0
      %p134 = por %p132, %p133
      %s136 = sadd.s32 %s135, 1
      %p139 = scmp.eq.s32.totalorder %s19, 1
      %p140 = scmp.ne.s32.totalorder %s135, %s137
      %p141 = scmp.eq.s32.totalorder %s19, 0
      %p142 = por %p140, %p141
      %p143 = scmp.ne.s32.totalorder %s135, %s137
      %p144 = scmp.eq.s32.totalorder %s24, 1
      %p145 = por %p143, %p144
      %p146 = scmp.ne.s32.totalorder %s137, %s138
      %p147 = scmp.eq.s32.totalorder %s24, 0
      %p148 = por %p146, %p147
      %p149 = scmp.ne.s32.totalorder %s137, %s138
      %p150 = scmp.eq.s32.totalorder %s25, 1
      %p151 = por %p149, %p150
      %p153 = scmp.ne.s32.totalorder %s138, %s152
      %p154 = scmp.eq.s32.totalorder %s25, 0
      %p155 = por %p153, %p154
      %s157 = sadd.s32 %s156, 1
      %p160 = scmp.eq.s32.totalorder %s19, 1
      %p161 = scmp.ne.s32.totalorder %s156, %s158
      %p162 = scmp.eq.s32.totalorder %s19, 0
      %p163 = por %p161, %p162
      %p164 = scmp.ne.s32.totalorder %s156, %s158
      %p165 = scmp.eq.s32.totalorder %s24, 1
      %p166 = por %p164, %p165
      %p167 = scmp.ne.s32.totalorder %s158, %s159
      %p168 = scmp.eq.s32.totalorder %s24, 0
      %p169 = por %p167, %p168
      %p170 = scmp.ne.s32.totalorder %s158, %s159
      %p171 = scmp.eq.s32.totalorder %s25, 1
      %p172 = por %p170, %p171
      %p174 = scmp.ne.s32.totalorder %s159, %s173
      %p175 = scmp.eq.s32.totalorder %s25, 0
      %p176 = por %p174, %p175
      %s178 = sadd.s32 %s177, 1
      %p181 = scmp.eq.s32.totalorder %s19, 1
      %p182 = scmp.ne.s32.totalorder %s177, %s179
      %p183 = scmp.eq.s32.totalorder %s19, 0
      %p184 = por %p182, %p183
      %p185 = scmp.ne.s32.totalorder %s177, %s179
      %p186 = scmp.eq.s32.totalorder %s24, 1
      %p187 = por %p185, %p186
      %p188 = scmp.ne.s32.totalorder %s179, %s180
      %p189 = scmp.eq.s32.totalorder %s24, 0
      %p190 = por %p188, %p189
      %p191 = scmp.ne.s32.totalorder %s179, %s180
      %p192 = scmp.eq.s32.totalorder %s25, 1
      %p193 = por %p191, %p192
      %p195 = scmp.ne.s32.totalorder %s180, %s194
      %p196 = scmp.eq.s32.totalorder %s25, 0
      %p197 = por %p195, %p196
      %s199 = sadd.s32 %s198, 1
      %p202 = scmp.eq.s32.totalorder %s19, 1
      %p203 = scmp.ne.s32.totalorder %s198, %s200
      %p204 = scmp.eq.s32.totalorder %s19, 0
      %p205 = por %p203, %p204
      %p206 = scmp.ne.s32.totalorder %s198, %s200
      %p207 = scmp.eq.s32.totalorder %s24, 1
      %p208 = por %p206, %p207
      %p209 = scmp.ne.s32.totalorder %s200, %s201
      %p210 = scmp.eq.s32.totalorder %s24, 0
      %p211 = por %p209, %p210
      %p212 = scmp.ne.s32.totalorder %s200, %s201
      %p213 = scmp.eq.s32.totalorder %s25, 1
      %p214 = por %p212, %p213
      %p216 = scmp.ne.s32.totalorder %s201, %s215
      %p217 = scmp.eq.s32.totalorder %s25, 0
      %p218 = por %p216, %p217
      %s220 = sadd.s32 %s219, 1
      %p223 = scmp.eq.s32.totalorder %s19, 1
      %p224 = scmp.ne.s32.totalorder %s219, %s221
      %p225 = scmp.eq.s32.totalorder %s19, 0
      %p226 = por %p224, %p225
      %p227 = scmp.ne.s32.totalorder %s219, %s221
      %p228 = scmp.eq.s32.totalorder %s24, 1
      %p229 = por %p227, %p228
      %p230 = scmp.ne.s32.totalorder %s221, %s222
      %p231 = scmp.eq.s32.totalorder %s24, 0
      %p232 = por %p230, %p231
      %p233 = scmp.ne.s32.totalorder %s221, %s222
      %p234 = scmp.eq.s32.totalorder %s25, 1
      %p235 = por %p233, %p234
      %p237 = scmp.ne.s32.totalorder %s222, %s236
      %p238 = scmp.eq.s32.totalorder %s25, 0
      %p239 = por %p237, %p238
      %s241 = sadd.s32 %s240, 1
      %p244 = scmp.eq.s32.totalorder %s19, 1
      %p245 = scmp.ne.s32.totalorder %s240, %s242
      %p246 = scmp.eq.s32.totalorder %s19, 0
      %p247 = por %p245, %p246
      %p248 = scmp.ne.s32.totalorder %s240, %s242
      %p249 = scmp.eq.s32.totalorder %s24, 1
      %p250 = por %p248, %p249
      %p251 = scmp.ne.s32.totalorder %s242, %s243
      %p252 = scmp.eq.s32.totalorder %s24, 0
      %p253 = por %p251, %p252
      %p254 = scmp.ne.s32.totalorder %s242, %s243
      %p255 = scmp.eq.s32.totalorder %s25, 1
      %p256 = por %p254, %p255
      %p258 = scmp.ne.s32.totalorder %s243, %s257
      %p259 = scmp.eq.s32.totalorder %s25, 0
      %p260 = por %p258, %p259
      %s261 = ssub.s32 %s26, %s38
      %s262 = ssub.s32 %s27, %s34
      %s263 = sor.u32 %s261, %s262
      %p264 = scmp.eq.s32.totalorder %s263, 0
      %s266 = sadd.s32 %s265, 1
      %s267 = scalar_select %p264, %s265, %s266
      %p270 = pneg %p264
      %p271 = scmp.eq.s32.totalorder %s19, 1
      %p272 = por %p270, %p271
      %p273 = scmp.ne.s32.totalorder %s265, %s268
      %p274 = scmp.eq.s32.totalorder %s19, 0
      %p275 = por %p273, %p274
      %p276 = scmp.ne.s32.totalorder %s265, %s268
      %p277 = scmp.eq.s32.totalorder %s24, 1
      %p278 = por %p276, %p277
      %p279 = scmp.ne.s32.totalorder %s268, %s269
      %p280 = scmp.eq.s32.totalorder %s24, 0
      %p281 = por %p279, %p280
      %p282 = scmp.ne.s32.totalorder %s268, %s269
      %p283 = scmp.eq.s32.totalorder %s25, 1
      %p284 = por %p282, %p283
      %p286 = scmp.ne.s32.totalorder %s269, %s285
      %p287 = scmp.eq.s32.totalorder %s25, 0
      %p288 = por %p286, %p287
      %p289 = scmp.le.s32.totalorder 1, %s19
      %p290 = scmp.lt.s32.totalorder %s19, 3
      %p291 = pnand %p289, %p290
      %p292 = pneg %p291
      // Predicated region
      $region9: #{tpu_custom_call.1} parent=5 // pred_check
        _
      $region10: #{tpu_custom_call.1} parent=5 // pred_check_branch
        %294 = sbr.rel (%p291) target = $region12
      $region11: #{tpu_custom_call.1} parent=5 // pred_region
        %s295 = ssub.s32 %s19, 1
        // Predicated region
        $region13: #{tpu_custom_call.1} parent=11 // pred_check
          %p296 = pneg %p106
        $region14: #{tpu_custom_call.1} parent=11 // pred_check_branch
          %298 = sbr.rel (%p296) target = $region16
        $region15: #{tpu_custom_call.1} parent=11 // pred_region
          _
        $region16: #{tpu_custom_call.1} parent=11 // pred_fallthru
          _
        // Predicated region
        $region17: #{tpu_custom_call.1} parent=11 // pred_check
          %p299 = pneg %p127
        $region18: #{tpu_custom_call.1} parent=11 // pred_check_branch
          %301 = sbr.rel (%p299) target = $region20
        $region19: #{tpu_custom_call.1} parent=11 // pred_region
          _
        $region20: #{tpu_custom_call.1} parent=11 // pred_fallthru
          _
        // Predicated region
        $region21: #{tpu_custom_call.1} parent=11 // pred_check
          %p302 = pneg %p148
        $region22: #{tpu_custom_call.1} parent=11 // pred_check_branch
          %304 = sbr.rel (%p302) target = $region24
        $region23: #{tpu_custom_call.1} parent=11 // pred_region
          _
        $region24: #{tpu_custom_call.1} parent=11 // pred_fallthru
          _
        // Predicated region
        $region25: #{tpu_custom_call.1} parent=11 // pred_check
          %p305 = pneg %p169
        $region26: #{tpu_custom_call.1} parent=11 // pred_check_branch
          %307 = sbr.rel (%p305) target = $region28
        $region27: #{tpu_custom_call.1} parent=11 // pred_region
          _
        $region28: #{tpu_custom_call.1} parent=11 // pred_fallthru
          _
        // Predicated region
        $region29: #{tpu_custom_call.1} parent=11 // pred_check
          %p308 = pneg %p190
        $region30: #{tpu_custom_call.1} parent=11 // pred_check_branch
          %310 = sbr.rel (%p308) target = $region32
        $region31: #{tpu_custom_call.1} parent=11 // pred_region
          _
        $region32: #{tpu_custom_call.1} parent=11 // pred_fallthru
          _
        // Predicated region
        $region33: #{tpu_custom_call.1} parent=11 // pred_check
          %p311 = pneg %p211
        $region34: #{tpu_custom_call.1} parent=11 // pred_check_branch
          %313 = sbr.rel (%p311) target = $region36
        $region35: #{tpu_custom_call.1} parent=11 // pred_region
          _
        $region36: #{tpu_custom_call.1} parent=11 // pred_fallthru
          _
        // Predicated region
        $region37: #{tpu_custom_call.1} parent=11 // pred_check
          %p314 = pneg %p232
        $region38: #{tpu_custom_call.1} parent=11 // pred_check_branch
          %316 = sbr.rel (%p314) target = $region40
        $region39: #{tpu_custom_call.1} parent=11 // pred_region
          _
        $region40: #{tpu_custom_call.1} parent=11 // pred_fallthru
          _
        // Predicated region
        $region41: #{tpu_custom_call.1} parent=11 // pred_check
          %p317 = pneg %p253
        $region42: #{tpu_custom_call.1} parent=11 // pred_check_branch
          %319 = sbr.rel (%p317) target = $region44
        $region43: #{tpu_custom_call.1} parent=11 // pred_region
          _
        $region44: #{tpu_custom_call.1} parent=11 // pred_fallthru
          _
      $region12: #{tpu_custom_call.1} parent=5 // pred_fallthru
        _
      %p320 = scmp.lt.s32.totalorder %s19, 2
      // Predicated region
      $region45: #{tpu_custom_call.1} parent=5 // pred_check
        %p321 = pneg %p320
      $region46: #{tpu_custom_call.1} parent=5 // pred_check_branch
        %323 = sbr.rel (%p321) target = $region48
      $region47: #{tpu_custom_call.1} parent=5 // pred_region
        // Predicated region
        $region49: #{tpu_custom_call.1} parent=47 // pred_check
          %p324 = pneg %p53
        $region50: #{tpu_custom_call.1} parent=47 // pred_check_branch
          %326 = sbr.rel (%p324) target = $region52
        $region51: #{tpu_custom_call.1} parent=47 // pred_region
          %p327 = scmp.lt.s32.totalorder %s26, 1
          %s328 = scalar_select %p327, %s26, 1
          %p329 = scmp.lt.s32.totalorder %s27, 0
          %s330 = scalar_select %p329, %s27, 0
          %s331 = sadd.s32 %s330, %s328
          %s332 = smul.addr %s331, 8
          %s333 = scalar_lea.vmem %s0, %s332
        $region52: #{tpu_custom_call.1} parent=47 // pred_fallthru
          _
        // Predicated region
        $region53: #{tpu_custom_call.1} parent=47 // pred_check
          %p334 = pneg %p79
        $region54: #{tpu_custom_call.1} parent=47 // pred_check_branch
          %336 = sbr.rel (%p334) target = $region56
        $region55: #{tpu_custom_call.1} parent=47 // pred_region
          %p337 = scmp.lt.s32.totalorder %s26, 1
          %s338 = scalar_select %p337, %s26, 1
          %s339 = smul.addr %s338, 8
          %s340 = scalar_lea.vmem %s1, %s339
        $region56: #{tpu_custom_call.1} parent=47 // pred_fallthru
          _
      $region48: #{tpu_custom_call.1} parent=5 // pred_fallthru
        _
      %p341 = scmp.le.s32.totalorder 1, %s19
      %p342 = scmp.lt.s32.totalorder %s19, 3
      %p343 = pnand %p341, %p342
      %p344 = pneg %p343
      // Predicated region
      $region57: #{tpu_custom_call.1} parent=5 // pred_check
        _
      $region58: #{tpu_custom_call.1} parent=5 // pred_check_branch
        %346 = sbr.rel (%p343) target = $region60
      $region59: #{tpu_custom_call.1} parent=5 // pred_region
        %s347 = ssub.s32 %s19, 1
        %p348 = scmp.lt.s32.totalorder %s28, 1
        %s349 = scalar_select %p348, %s28, 1
        %p350 = scmp.lt.s32.totalorder %s29, 0
        %s351 = scalar_select %p350, %s29, 0
        %s352 = sadd.s32 %s351, %s349
        %s353 = smul.addr %s352, 8
        %s354 = scalar_lea.vmem %s0, %s353
        %p355 = pneg %p59
        %p356 = pneg %p56
        %p357 = scmp.lt.s32.totalorder %s28, 1
        %s358 = scalar_select %p357, %s28, 1
        %s359 = smul.addr %s358, 8
        %s360 = scalar_lea.vmem %s1, %s359
        %p361 = pneg %p85
        %p362 = pneg %p82
        %p363 = pneg %p106
        %p364 = pneg %p103
        %p365 = pneg %p127
        %p366 = pneg %p124
        %p367 = pneg %p148
        %p368 = pneg %p145
        %p369 = pneg %p169
        %p370 = pneg %p166
        %p371 = pneg %p190
        %p372 = pneg %p187
        %p373 = pneg %p211
        %p374 = pneg %p208
        %p375 = pneg %p232
        %p376 = pneg %p229
        %p377 = pneg %p253
        %p378 = pneg %p250
        %p379 = pneg %p281
        %p380 = pneg %p278
        %s381 = sand.u32 %s268, 1
        %s382 = scalar_lea.sflag [#allocation4], %s381
        %s383 = sand.u32 %s268, 1
        %s384 = smul.addr %s383, 8
        %s385 = scalar_lea.vmem [#allocation3], %s384
        %p386 = scmp.lt.s32.totalorder %s28, 1
        %s387 = scalar_select %p386, %s28, 1
        %p388 = scmp.lt.s32.totalorder %s29, 0
        %s389 = scalar_select %p388, %s29, 0
        %s390 = sadd.s32 %s389, %s387
        %s391 = smul.addr %s390, 8
        %s392 = scalar_lea.vmem %s0, %s391
        %p393 = scmp.lt.s32.totalorder %s28, 1
        %s394 = scalar_select %p393, %s28, 1
        %s395 = smul.addr %s394, 8
        %s396 = scalar_lea.vmem %s1, %s395
        %v398 = vld [vmem:[%s392] sm:$0xff]
        %v399 = vpack.c.bf16 %v398, %v398
        %v400 = vld [vmem:[%s396] sm:$0xff]
        %v401 = vpack.c.bf16 %v400, %v400
        %vm402 = vcmask 261120
        %403 = vst.msk [vmem:[#allocation2] sm:$0xff] %vm402, 0.0
        %v404 = vld [vmem:[%s2] sm:$0xf]
        %v405 = vld [vmem:[%s2 + $0x4] sm:$0xf]
        %v406 = vld [vmem:[%s2 + $0x8] sm:$0xf]
        %v407 = vld [vmem:[%s2 + $0xc] sm:$0xf]
        %v412 = vunpack.c.l.b16 %v404
        %v413 = vunpack.c.l.b16 %v405
        %v414 = vunpack.c.l.b16 %v406
        %v415 = vunpack.c.l.b16 %v407
        %v416 = vpack.c.b16 %v413, %v412
        %v417 = vpack.c.b16 %v415, %v414
        %v421 = vsel %vm402, %v399, 0
        %423 = vmatprep.subr.bf16.mxu0 0
        %424 = vmatpush1.bf16.msra.mxu0 %v416
        %425 = vmatprep.subr.bf16.mxu0 0
        %426 = vmatpush1.bf16.msra.mxu0 %v417
        %427 = vmatprep.subr.bf16.mxu0 0
        %428 = vmatpush1.bf16.msra.mxu0 0
        %429 = vmatprep.subr.bf16.mxu0 0
        %430 = vmatpush1.bf16.msra.mxu0 0
        %431 = vmatprep.subr.bf16.mxu0 0
        %432 = vmatpush1.bf16.msra.mxu0 0
        %433 = vmatprep.subr.bf16.mxu0 0
        %434 = vmatpush1.bf16.msra.mxu0 0
        %435 = vmatprep.subr.bf16.mxu0 0
        %436 = vmatpush1.bf16.msra.mxu0 0
        %437 = vmatprep.subr.bf16.mxu0 0
        %438 = vmatpush1.bf16.msra.mxu0 0
        %439 = vmatprep.subr.bf16.mxu0 0
        %440 = vmatpush1.bf16.msra.mxu0 0
        %441 = vmatprep.subr.bf16.mxu0 0
        %442 = vmatpush1.bf16.msra.mxu0 0
        %443 = vmatprep.subr.bf16.mxu0 0
        %444 = vmatpush1.bf16.msra.mxu0 0
        %445 = vmatprep.subr.bf16.mxu0 0
        %446 = vmatpush1.bf16.msra.mxu0 0
        %447 = vmatprep.subr.bf16.mxu0 0
        %448 = vmatpush1.bf16.msra.mxu0 0
        %449 = vmatprep.subr.bf16.mxu0 0
        %450 = vmatpush1.bf16.msra.mxu0 0
        %451 = vmatprep.subr.bf16.mxu0 0
        %452 = vmatpush1.bf16.msra.mxu0 0
        %453 = vmatprep.subr.bf16.mxu0 0
        %454 = vmatpush1.bf16.msra.mxu0 0
        %455 = vmatprep.mubr.bf16.mxu0 0
        %456 = vmatmul.mubr.bf16.gmra.mrb[0].mxu0 %v421
        %v457 = vpop.f32.mrb[0].mxu0
        %v458 = vadd.f32 0.0, %v457
        %v459 = vpop.f32.mrb[0].mxu0
        %v460 = vpop.f32.mrb[0].mxu0
        %v461 = vpop.f32.mrb[0].mxu0
        %462 = vdwg.mxu0
        %v463 = vld [vmem:[%s3] sm:$0xf]
        %v464 = vld [vmem:[%s3 + $0x4] sm:$0xf]
        %v465 = vld [vmem:[%s3 + $0x8] sm:$0xf]
        %v466 = vld [vmem:[%s3 + $0xc] sm:$0xf]
        %v471 = vunpack.c.l.b16 %v463
        %v472 = vunpack.c.l.b16 %v464
        %v473 = vunpack.c.l.b16 %v465
        %v474 = vunpack.c.l.b16 %v466
        %v475 = vpack.c.b16 %v472, %v471
        %v476 = vpack.c.b16 %v474, %v473
        %v480 = vsel %vm402, %v401, 0
        %482 = vmatprep.subr.bf16.mxu0 0
        %483 = vmatpush1.bf16.msra.mxu0 %v475
        %484 = vmatprep.subr.bf16.mxu0 0
        %485 = vmatpush1.bf16.msra.mxu0 %v476
        %486 = vmatprep.subr.bf16.mxu0 0
        %487 = vmatpush1.bf16.msra.mxu0 0
        %488 = vmatprep.subr.bf16.mxu0 0
        %489 = vmatpush1.bf16.msra.mxu0 0
        %490 = vmatprep.subr.bf16.mxu0 0
        %491 = vmatpush1.bf16.msra.mxu0 0
        %492 = vmatprep.subr.bf16.mxu0 0
        %493 = vmatpush1.bf16.msra.mxu0 0
        %494 = vmatprep.subr.bf16.mxu0 0
        %495 = vmatpush1.bf16.msra.mxu0 0
        %496 = vmatprep.subr.bf16.mxu0 0
        %497 = vmatpush1.bf16.msra.mxu0 0
        %498 = vmatprep.subr.bf16.mxu0 0
        %499 = vmatpush1.bf16.msra.mxu0 0
        %500 = vmatprep.subr.bf16.mxu0 0
        %501 = vmatpush1.bf16.msra.mxu0 0
        %502 = vmatprep.subr.bf16.mxu0 0
        %503 = vmatpush1.bf16.msra.mxu0 0
        %504 = vmatprep.subr.bf16.mxu0 0
        %505 = vmatpush1.bf16.msra.mxu0 0
        %506 = vmatprep.subr.bf16.mxu0 0
        %507 = vmatpush1.bf16.msra.mxu0 0
        %508 = vmatprep.subr.bf16.mxu0 0
        %509 = vmatpush1.bf16.msra.mxu0 0
        %510 = vmatprep.subr.bf16.mxu0 0
        %511 = vmatpush1.bf16.msra.mxu0 0
        %512 = vmatprep.subr.bf16.mxu0 0
        %513 = vmatpush1.bf16.msra.mxu0 0
        %514 = vmatprep.mubr.bf16.mxu0 0
        %515 = vmatmul.mubr.bf16.gmra.mrb[0].mxu0 %v480
        %v516 = vpop.f32.mrb[0].mxu0
        %v517 = vadd.f32 0.0, %v516
        %v518 = vpop.f32.mrb[0].mxu0
        %v519 = vpop.f32.mrb[0].mxu0
        %v520 = vpop.f32.mrb[0].mxu0
        %521 = vdwg.mxu0
        %v522 = vld [vmem:[%s4] sm:$0xf]
        %v523 = vld [vmem:[%s4 + $0x4] sm:$0xf]
        %v524 = vld [vmem:[%s4 + $0x8] sm:$0xf]
        %v525 = vld [vmem:[%s4 + $0xc] sm:$0xf]
        %v530 = vunpack.c.l.b16 %v522
        %v531 = vunpack.c.l.b16 %v523
        %v532 = vunpack.c.l.b16 %v524
        %v533 = vunpack.c.l.b16 %v525
        %v534 = vpack.c.b16 %v531, %v530
        %v535 = vpack.c.b16 %v533, %v532
        %538 = vmatprep.subr.bf16.mxu0 0
        %539 = vmatpush1.bf16.msra.mxu0 %v534
        %540 = vmatprep.subr.bf16.mxu0 0
        %541 = vmatpush1.bf16.msra.mxu0 %v535
        %542 = vmatprep.subr.bf16.mxu0 0
        %543 = vmatpush1.bf16.msra.mxu0 0
        %544 = vmatprep.subr.bf16.mxu0 0
        %545 = vmatpush1.bf16.msra.mxu0 0
        %546 = vmatprep.subr.bf16.mxu0 0
        %547 = vmatpush1.bf16.msra.mxu0 0
        %548 = vmatprep.subr.bf16.mxu0 0
        %549 = vmatpush1.bf16.msra.mxu0 0
        %550 = vmatprep.subr.bf16.mxu0 0
        %551 = vmatpush1.bf16.msra.mxu0 0
        %552 = vmatprep.subr.bf16.mxu0 0
        %553 = vmatpush1.bf16.msra.mxu0 0
        %554 = vmatprep.subr.bf16.mxu0 0
        %555 = vmatpush1.bf16.msra.mxu0 0
        %556 = vmatprep.subr.bf16.mxu0 0
        %557 = vmatpush1.bf16.msra.mxu0 0
        %558 = vmatprep.subr.bf16.mxu0 0
        %559 = vmatpush1.bf16.msra.mxu0 0
        %560 = vmatprep.subr.bf16.mxu0 0
        %561 = vmatpush1.bf16.msra.mxu0 0
        %562 = vmatprep.subr.bf16.mxu0 0
        %563 = vmatpush1.bf16.msra.mxu0 0
        %564 = vmatprep.subr.bf16.mxu0 0
        %565 = vmatpush1.bf16.msra.mxu0 0
        %566 = vmatprep.subr.bf16.mxu0 0
        %567 = vmatpush1.bf16.msra.mxu0 0
        %568 = vmatprep.subr.bf16.mxu0 0
        %569 = vmatpush1.bf16.msra.mxu0 0
        %570 = vmatprep.mubr.bf16.mxu0 0
        %571 = vmatmul.mubr.bf16.gmra.mrb[0].mxu0 %v480
        %v572 = vpop.f32.mrb[0].mxu0
        %v573 = vadd.f32 0.0, %v572
        %v574 = vpop.f32.mrb[0].mxu0
        %v575 = vpop.f32.mrb[0].mxu0
        %v576 = vpop.f32.mrb[0].mxu0
        %577 = vdwg.mxu0
        %v578 = vpack.c.bf16 %v458, %v458
        %v579 = vpack.c.bf16 %v517, %v517
        %vm580 = vcmask 64512
        %v582 = vsel %vm580, %v578, 0
        %v585 = vsel %vm580, %v579, 0
        %587 = vmatprep.subr.bf16.mxu0 0
        %588 = vmatpush1.bf16.xpose.msra.mxu0 %v585
        %589 = vmatprep.subr.bf16.mxu0 0
        %590 = vmatpush1.bf16.xpose.msra.mxu0 0
        %591 = vmatprep.subr.bf16.mxu0 0
        %592 = vmatpush1.bf16.xpose.msra.mxu0 0
        %593 = vmatprep.subr.bf16.mxu0 0
        %594 = vmatpush1.bf16.xpose.msra.mxu0 0
        %595 = vmatprep.subr.bf16.mxu0 0
        %596 = vmatpush1.bf16.xpose.msra.mxu0 0
        %597 = vmatprep.subr.bf16.mxu0 0
        %598 = vmatpush1.bf16.xpose.msra.mxu0 0
        %599 = vmatprep.subr.bf16.mxu0 0
        %600 = vmatpush1.bf16.xpose.msra.mxu0 0
        %601 = vmatprep.subr.bf16.mxu0 0
        %602 = vmatpush1.bf16.xpose.msra.mxu0 0
        %603 = vmatprep.subr.bf16.mxu0 0
        %604 = vmatpush1.bf16.xpose.msra.mxu0 0
        %605 = vmatprep.subr.bf16.mxu0 0
        %606 = vmatpush1.bf16.xpose.msra.mxu0 0
        %607 = vmatprep.subr.bf16.mxu0 0
        %608 = vmatpush1.bf16.xpose.msra.mxu0 0
        %609 = vmatprep.subr.bf16.mxu0 0
        %610 = vmatpush1.bf16.xpose.msra.mxu0 0
        %611 = vmatprep.subr.bf16.mxu0 0
        %612 = vmatpush1.bf16.xpose.msra.mxu0 0
        %613 = vmatprep.subr.bf16.mxu0 0
        %614 = vmatpush1.bf16.xpose.msra.mxu0 0
        %615 = vmatprep.subr.bf16.mxu0 0
        %616 = vmatpush1.bf16.xpose.msra.mxu0 0
        %617 = vmatprep.subr.bf16.mxu0 0
        %618 = vmatpush1.bf16.xpose.msra.mxu0 0
        %619 = vmatprep.mubr.bf16.mxu0 0
        %620 = vmatmul.mubr.bf16.gmra.mrb[0].mxu0 %v582
        %v621 = vpop.f32.mrb[0].mxu0
        %v622 = vadd.f32 0.0, %v621
        %v623 = vpop.f32.mrb[0].mxu0
        %v624 = vpop.f32.mrb[0].mxu0
        %v625 = vpop.f32.mrb[0].mxu0
        %626 = vdwg.mxu0
        %v627 = vsel %vm580, %v622, -inf
        %628 = vmax.xlane.f32.xlu0 %v627
        %v629 = vpop.xlane.xlu0 %628
        %v630 = vsub.f32 %v622, %v629
        %v631 = vmul.f32 %v630, 1.442695
        %v632 = vpow.pop %v631
        %v633 = vsel %vm580, %v632, 0.0
        %634 = vadd.xlane.f32.xlu0 %v633
        %v635 = vpop.xlane.xlu0 %634
        %v636 = vrcp.pop %v635
        %v637 = vmul.f32 %v632, %v636
        %v638 = vpack.c.bf16 %v637, %v637
        %v639 = vpack.c.bf16 %v573, %v573
        %v641 = vsel %vm580, %v638, 0
        %vm643 = vcmask 1043456
        %v645 = vsel %vm643, %v639, 0
        %647 = vmatprep.subr.bf16.mxu0 0
        %648 = vmatpush1.bf16.msra.mxu0 %v645
        %649 = vmatprep.subr.bf16.mxu0 0
        %650 = vmatpush1.bf16.msra.mxu0 0
        %651 = vmatprep.subr.bf16.mxu0 0
        %652 = vmatpush1.bf16.msra.mxu0 0
        %653 = vmatprep.subr.bf16.mxu0 0
        %654 = vmatpush1.bf16.msra.mxu0 0
        %655 = vmatprep.subr.bf16.mxu0 0
        %656 = vmatpush1.bf16.msra.mxu0 0
        %657 = vmatprep.subr.bf16.mxu0 0
        %658 = vmatpush1.bf16.msra.mxu0 0
        %659 = vmatprep.subr.bf16.mxu0 0
        %660 = vmatpush1.bf16.msra.mxu0 0
        %661 = vmatprep.subr.bf16.mxu0 0
        %662 = vmatpush1.bf16.msra.mxu0 0
        %663 = vmatprep.subr.bf16.mxu0 0
        %664 = vmatpush1.bf16.msra.mxu0 0
        %665 = vmatprep.subr.bf16.mxu0 0
        %666 = vmatpush1.bf16.msra.mxu0 0
        %667 = vmatprep.subr.bf16.mxu0 0
        %668 = vmatpush1.bf16.msra.mxu0 0
        %669 = vmatprep.subr.bf16.mxu0 0
        %670 = vmatpush1.bf16.msra.mxu0 0
        %671 = vmatprep.subr.bf16.mxu0 0
        %672 = vmatpush1.bf16.msra.mxu0 0
        %673 = vmatprep.subr.bf16.mxu0 0
        %674 = vmatpush1.bf16.msra.mxu0 0
        %675 = vmatprep.subr.bf16.mxu0 0
        %676 = vmatpush1.bf16.msra.mxu0 0
        %677 = vmatprep.subr.bf16.mxu0 0
        %678 = vmatpush1.bf16.msra.mxu0 0
        %679 = vmatprep.mubr.bf16.mxu0 0
        %680 = vmatmul.mubr.bf16.gmra.mrb[0].mxu0 %v641
        %v681 = vpop.f32.mrb[0].mxu0
        %v682 = vadd.f32 0.0, %v681
        %v683 = vpop.f32.mrb[0].mxu0
        %v684 = vpop.f32.mrb[0].mxu0
        %v685 = vpop.f32.mrb[0].mxu0
        %686 = vdwg.mxu0
        %v687 = vld [vmem:[#allocation2] sm:$0xff]
        %v688 = vpack.c.bf16 %v682, %v682
        %v689 = vld [vmem:[%s5] sm:$0xf]
        %v691 = vsel %vm580, %v688, 0
        %v694 = vsel %vm643, %v689, 0
        %696 = vmatprep.subr.bf16.mxu0 0
        %697 = vmatpush1.bf16.msra.mxu0 %v694
        %698 = vmatprep.subr.bf16.mxu0 0
        %699 = vmatpush1.bf16.msra.mxu0 0
        %700 = vmatprep.subr.bf16.mxu0 0
        %701 = vmatpush1.bf16.msra.mxu0 0
        %702 = vmatprep.subr.bf16.mxu0 0
        %703 = vmatpush1.bf16.msra.mxu0 0
        %704 = vmatprep.subr.bf16.mxu0 0
        %705 = vmatpush1.bf16.msra.mxu0 0
        %706 = vmatprep.subr.bf16.mxu0 0
        %707 = vmatpush1.bf16.msra.mxu0 0
        %708 = vmatprep.subr.bf16.mxu0 0
        %709 = vmatpush1.bf16.msra.mxu0 0
        %710 = vmatprep.subr.bf16.mxu0 0
        %711 = vmatpush1.bf16.msra.mxu0 0
        %712 = vmatprep.subr.bf16.mxu0 0
        %713 = vmatpush1.bf16.msra.mxu0 0
        %714 = vmatprep.subr.bf16.mxu0 0
        %715 = vmatpush1.bf16.msra.mxu0 0
        %716 = vmatprep.subr.bf16.mxu0 0
        %717 = vmatpush1.bf16.msra.mxu0 0
        %718 = vmatprep.subr.bf16.mxu0 0
        %719 = vmatpush1.bf16.msra.mxu0 0
        %720 = vmatprep.subr.bf16.mxu0 0
        %721 = vmatpush1.bf16.msra.mxu0 0
        %722 = vmatprep.subr.bf16.mxu0 0
        %723 = vmatpush1.bf16.msra.mxu0 0
        %724 = vmatprep.subr.bf16.mxu0 0
        %725 = vmatpush1.bf16.msra.mxu0 0
        %726 = vmatprep.subr.bf16.mxu0 0
        %727 = vmatpush1.bf16.msra.mxu0 0
        %728 = vmatprep.mubr.bf16.mxu0 0
        %729 = vmatmul.mubr.bf16.gmra.mrb[0].mxu0 %v691
        %v730 = vpop.f32.mrb[0].mxu0
        %v731 = vadd.f32 0.0, %v730
        %v732 = vpop.f32.mrb[0].mxu0
        %v733 = vpop.f32.mrb[0].mxu0
        %v734 = vpop.f32.mrb[0].mxu0
        %735 = vdwg.mxu0
        %v736 = vadd.f32 %v687, %v731
        %737 = vst.msk [vmem:[#allocation2] sm:$0xff] %vm402, %v736
        %s738 = scalar_lea.vmem %s2, 16
        %v739 = vld [vmem:[%s738] sm:$0xf]
        %v740 = vld [vmem:[%s738 + $0x4] sm:$0xf]
        %v741 = vld [vmem:[%s738 + $0x8] sm:$0xf]
        %v742 = vld [vmem:[%s738 + $0xc] sm:$0xf]
        %v747 = vunpack.c.l.b16 %v739
        %v748 = vunpack.c.l.b16 %v740
        %v749 = vunpack.c.l.b16 %v741
        %v750 = vunpack.c.l.b16 %v742
        %v751 = vpack.c.b16 %v748, %v747
        %v752 = vpack.c.b16 %v750, %v749
        %755 = vmatprep.subr.bf16.mxu0 0
        %756 = vmatpush1.bf16.msra.mxu0 %v751
        %757 = vmatprep.subr.bf16.mxu0 0
        %758 = vmatpush1.bf16.msra.mxu0 %v752
        %759 = vmatprep.subr.bf16.mxu0 0
        %760 = vmatpush1.bf16.msra.mxu0 0
        %761 = vmatprep.subr.bf16.mxu0 0
        %762 = vmatpush1.bf16.msra.mxu0 0
        %763 = vmatprep.subr.bf16.mxu0 0
        %764 = vmatpush1.bf16.msra.mxu0 0
        %765 = vmatprep.subr.bf16.mxu0 0
        %766 = vmatpush1.bf16.msra.mxu0 0
        %767 = vmatprep.subr.bf16.mxu0 0
        %768 = vmatpush1.bf16.msra.mxu0 0
        %769 = vmatprep.subr.bf16.mxu0 0
        %770 = vmatpush1.bf16.msra.mxu0 0
        %771 = vmatprep.subr.bf16.mxu0 0
        %772 = vmatpush1.bf16.msra.mxu0 0
        %773 = vmatprep.subr.bf16.mxu0 0
        %774 = vmatpush1.bf16.msra.mxu0 0
        %775 = vmatprep.subr.bf16.mxu0 0
        %776 = vmatpush1.bf16.msra.mxu0 0
        %777 = vmatprep.subr.bf16.mxu0 0
        %778 = vmatpush1.bf16.msra.mxu0 0
        %779 = vmatprep.subr.bf16.mxu0 0
        %780 = vmatpush1.bf16.msra.mxu0 0
        %781 = vmatprep.subr.bf16.mxu0 0
        %782 = vmatpush1.bf16.msra.mxu0 0
        %783 = vmatprep.subr.bf16.mxu0 0
        %784 = vmatpush1.bf16.msra.mxu0 0
        %785 = vmatprep.subr.bf16.mxu0 0
        %786 = vmatpush1.bf16.msra.mxu0 0
        %787 = vmatprep.mubr.bf16.mxu0 0
        %788 = vmatmul.mubr.bf16.gmra.mrb[0].mxu0 %v421
        %v789 = vpop.f32.mrb[0].mxu0
        %v790 = vadd.f32 0.0, %v789
        %v791 = vpop.f32.mrb[0].mxu0
        %v792 = vpop.f32.mrb[0].mxu0
        %v793 = vpop.f32.mrb[0].mxu0
        %794 = vdwg.mxu0
        %s795 = scalar_lea.vmem %s3, 16
        %v796 = vld [vmem:[%s795] sm:$0xf]
        %v797 = vld [vmem:[%s795 + $0x4] sm:$0xf]
        %v798 = vld [vmem:[%s795 + $0x8] sm:$0xf]
        %v799 = vld [vmem:[%s795 + $0xc] sm:$0xf]
        %v804 = vunpack.c.l.b16 %v796
        %v805 = vunpack.c.l.b16 %v797
        %v806 = vunpack.c.l.b16 %v798
        %v807 = vunpack.c.l.b16 %v799
        %v808 = vpack.c.b16 %v805, %v804
        %v809 = vpack.c.b16 %v807, %v806
        %812 = vmatprep.subr.bf16.mxu0 0
        %813 = vmatpush1.bf16.msra.mxu0 %v808
        %814 = vmatprep.subr.bf16.mxu0 0
        %815 = vmatpush1.bf16.msra.mxu0 %v809
        %816 = vmatprep.subr.bf16.mxu0 0
        %817 = vmatpush1.bf16.msra.mxu0 0
        %818 = vmatprep.subr.bf16.mxu0 0
        %819 = vmatpush1.bf16.msra.mxu0 0
        %820 = vmatprep.subr.bf16.mxu0 0
        %821 = vmatpush1.bf16.msra.mxu0 0
        %822 = vmatprep.subr.bf16.mxu0 0
        %823 = vmatpush1.bf16.msra.mxu0 0
        %824 = vmatprep.subr.bf16.mxu0 0
        %825 = vmatpush1.bf16.msra.mxu0 0
        %826 = vmatprep.subr.bf16.mxu0 0
        %827 = vmatpush1.bf16.msra.mxu0 0
        %828 = vmatprep.subr.bf16.mxu0 0
        %829 = vmatpush1.bf16.msra.mxu0 0
        %830 = vmatprep.subr.bf16.mxu0 0
        %831 = vmatpush1.bf16.msra.mxu0 0
        %832 = vmatprep.subr.bf16.mxu0 0
        %833 = vmatpush1.bf16.msra.mxu0 0
        %834 = vmatprep.subr.bf16.mxu0 0
        %835 = vmatpush1.bf16.msra.mxu0 0
        %836 = vmatprep.subr.bf16.mxu0 0
        %837 = vmatpush1.bf16.msra.mxu0 0
        %838 = vmatprep.subr.bf16.mxu0 0
        %839 = vmatpush1.bf16.msra.mxu0 0
        %840 = vmatprep.subr.bf16.mxu0 0
        %841 = vmatpush1.bf16.msra.mxu0 0
        %842 = vmatprep.subr.bf16.mxu0 0
        %843 = vmatpush1.bf16.msra.mxu0 0
        %844 = vmatprep.mubr.bf16.mxu0 0
        %845 = vmatmul.mubr.bf16.gmra.mrb[0].mxu0 %v480
        %v846 = vpop.f32.mrb[0].mxu0
        %v847 = vadd.f32 0.0, %v846
        %v848 = vpop.f32.mrb[0].mxu0
        %v849 = vpop.f32.mrb[0].mxu0
        %v850 = vpop.f32.mrb[0].mxu0
        %851 = vdwg.mxu0
        %s852 = scalar_lea.vmem %s4, 16
        %v853 = vld [vmem:[%s852] sm:$0xf]
        %v854 = vld [vmem:[%s852 + $0x4] sm:$0xf]
        %v855 = vld [vmem:[%s852 + $0x8] sm:$0xf]
        %v856 = vld [vmem:[%s852 + $0xc] sm:$0xf]
        %v861 = vunpack.c.l.b16 %v853
        %v862 = vunpack.c.l.b16 %v854
        %v863 = vunpack.c.l.b16 %v855
        %v864 = vunpack.c.l.b16 %v856
        %v865 = vpack.c.b16 %v862, %v861
        %v866 = vpack.c.b16 %v864, %v863
        %869 = vmatprep.subr.bf16.mxu0 0
        %870 = vmatpush1.bf16.msra.mxu0 %v865
        %871 = vmatprep.subr.bf16.mxu0 0
        %872 = vmatpush1.bf16.msra.mxu0 %v866
        %873 = vmatprep.subr.bf16.mxu0 0
        %874 = vmatpush1.bf16.msra.mxu0 0
        %875 = vmatprep.subr.bf16.mxu0 0
        %876 = vmatpush1.bf16.msra.mxu0 0
        %877 = vmatprep.subr.bf16.mxu0 0
        %878 = vmatpush1.bf16.msra.mxu0 0
        %879 = vmatprep.subr.bf16.mxu0 0
        %880 = vmatpush1.bf16.msra.mxu0 0
        %881 = vmatprep.subr.bf16.mxu0 0
        %882 = vmatpush1.bf16.msra.mxu0 0
        %883 = vmatprep.subr.bf16.mxu0 0
        %884 = vmatpush1.bf16.msra.mxu0 0
        %885 = vmatprep.subr.bf16.mxu0 0
        %886 = vmatpush1.bf16.msra.mxu0 0
        %887 = vmatprep.subr.bf16.mxu0 0
        %888 = vmatpush1.bf16.msra.mxu0 0
        %889 = vmatprep.subr.bf16.mxu0 0
        %890 = vmatpush1.bf16.msra.mxu0 0
        %891 = vmatprep.subr.bf16.mxu0 0
        %892 = vmatpush1.bf16.msra.mxu0 0
        %893 = vmatprep.subr.bf16.mxu0 0
        %894 = vmatpush1.bf16.msra.mxu0 0
        %895 = vmatprep.subr.bf16.mxu0 0
        %896 = vmatpush1.bf16.msra.mxu0 0
        %897 = vmatprep.subr.bf16.mxu0 0
        %898 = vmatpush1.bf16.msra.mxu0 0
        %899 = vmatprep.subr.bf16.mxu0 0
        %900 = vmatpush1.bf16.msra.mxu0 0
        %901 = vmatprep.mubr.bf16.mxu0 0
        %902 = vmatmul.mubr.bf16.gmra.mrb[0].mxu0 %v480
        %v903 = vpop.f32.mrb[0].mxu0
        %v904 = vadd.f32 0.0, %v903
        %v905 = vpop.f32.mrb[0].mxu0
        %v906 = vpop.f32.mrb[0].mxu0
        %v907 = vpop.f32.mrb[0].mxu0
        %908 = vdwg.mxu0
        %v909 = vpack.c.bf16 %v790, %v790
        %v910 = vpack.c.bf16 %v847, %v847
        %v912 = vsel %vm580, %v909, 0
        %v915 = vsel %vm580, %v910, 0
        %917 = vmatprep.subr.bf16.mxu0 0
        %918 = vmatpush1.bf16.xpose.msra.mxu0 %v915
        %919 = vmatprep.subr.bf16.mxu0 0
        %920 = vmatpush1.bf16.xpose.msra.mxu0 0
        %921 = vmatprep.subr.bf16.mxu0 0
        %922 = vmatpush1.bf16.xpose.msra.mxu0 0
        %923 = vmatprep.subr.bf16.mxu0 0
        %924 = vmatpush1.bf16.xpose.msra.mxu0 0
        %925 = vmatprep.subr.bf16.mxu0 0
        %926 = vmatpush1.bf16.xpose.msra.mxu0 0
        %927 = vmatprep.subr.bf16.mxu0 0
        %928 = vmatpush1.bf16.xpose.msra.mxu0 0
        %929 = vmatprep.subr.bf16.mxu0 0
        %930 = vmatpush1.bf16.xpose.msra.mxu0 0
        %931 = vmatprep.subr.bf16.mxu0 0
        %932 = vmatpush1.bf16.xpose.msra.mxu0 0
        %933 = vmatprep.subr.bf16.mxu0 0
        %934 = vmatpush1.bf16.xpose.msra.mxu0 0
        %935 = vmatprep.subr.bf16.mxu0 0
        %936 = vmatpush1.bf16.xpose.msra.mxu0 0
        %937 = vmatprep.subr.bf16.mxu0 0
        %938 = vmatpush1.bf16.xpose.msra.mxu0 0
        %939 = vmatprep.subr.bf16.mxu0 0
        %940 = vmatpush1.bf16.xpose.msra.mxu0 0
        %941 = vmatprep.subr.bf16.mxu0 0
        %942 = vmatpush1.bf16.xpose.msra.mxu0 0
        %943 = vmatprep.subr.bf16.mxu0 0
        %944 = vmatpush1.bf16.xpose.msra.mxu0 0
        %945 = vmatprep.subr.bf16.mxu0 0
        %946 = vmatpush1.bf16.xpose.msra.mxu0 0
        %947 = vmatprep.subr.bf16.mxu0 0
        %948 = vmatpush1.bf16.xpose.msra.mxu0 0
        %949 = vmatprep.mubr.bf16.mxu0 0
        %950 = vmatmul.mubr.bf16.gmra.mrb[0].mxu0 %v912
        %v951 = vpop.f32.mrb[0].mxu0
        %v952 = vadd.f32 0.0, %v951
        %v953 = vpop.f32.mrb[0].mxu0
        %v954 = vpop.f32.mrb[0].mxu0
        %v955 = vpop.f32.mrb[0].mxu0
        %956 = vdwg.mxu0
        %v957 = vsel %vm580, %v952, -inf
        %958 = vmax.xlane.f32.xlu0 %v957
        %v959 = vpop.xlane.xlu0 %958
        %v960 = vsub.f32 %v952, %v959
        %v961 = vmul.f32 %v960, 1.442695
        %v962 = vpow.pop %v961
        %v963 = vsel %vm580, %v962, 0.0
        %964 = vadd.xlane.f32.xlu0 %v963
        %v965 = vpop.xlane.xlu0 %964
        %v966 = vrcp.pop %v965
        %v967 = vmul.f32 %v962, %v966
        %v968 = vpack.c.bf16 %v967, %v967
        %v969 = vpack.c.bf16 %v904, %v904
        %v971 = vsel %vm580, %v968, 0
        %v974 = vsel %vm643, %v969, 0
        %976 = vmatprep.subr.bf16.mxu0 0
        %977 = vmatpush1.bf16.msra.mxu0 %v974
        %978 = vmatprep.subr.bf16.mxu0 0
        %979 = vmatpush1.bf16.msra.mxu0 0
        %980 = vmatprep.subr.bf16.mxu0 0
        %981 = vmatpush1.bf16.msra.mxu0 0
        %982 = vmatprep.subr.bf16.mxu0 0
        %983 = vmatpush1.bf16.msra.mxu0 0
        %984 = vmatprep.subr.bf16.mxu0 0
        %985 = vmatpush1.bf16.msra.mxu0 0
        %986 = vmatprep.subr.bf16.mxu0 0
        %987 = vmatpush1.bf16.msra.mxu0 0
        %988 = vmatprep.subr.bf16.mxu0 0
        %989 = vmatpush1.bf16.msra.mxu0 0
        %990 = vmatprep.subr.bf16.mxu0 0
        %991 = vmatpush1.bf16.msra.mxu0 0
        %992 = vmatprep.subr.bf16.mxu0 0
        %993 = vmatpush1.bf16.msra.mxu0 0
        %994 = vmatprep.subr.bf16.mxu0 0
        %995 = vmatpush1.bf16.msra.mxu0 0
        %996 = vmatprep.subr.bf16.mxu0 0
        %997 = vmatpush1.bf16.msra.mxu0 0
        %998 = vmatprep.subr.bf16.mxu0 0
        %999 = vmatpush1.bf16.msra.mxu0 0
        %1000 = vmatprep.subr.bf16.mxu0 0
        %1001 = vmatpush1.bf16.msra.mxu0 0
        %1002 = vmatprep.subr.bf16.mxu0 0
        %1003 = vmatpush1.bf16.msra.mxu0 0
        %1004 = vmatprep.subr.bf16.mxu0 0
        %1005 = vmatpush1.bf16.msra.mxu0 0
        %1006 = vmatprep.subr.bf16.mxu0 0
        %1007 = vmatpush1.bf16.msra.mxu0 0
        %1008 = vmatprep.mubr.bf16.mxu0 0
        %1009 = vmatmul.mubr.bf16.gmra.mrb[0].mxu0 %v971
        %v1010 = vpop.f32.mrb[0].mxu0
        %v1011 = vadd.f32 0.0, %v1010
        %v1012 = vpop.f32.mrb[0].mxu0
        %v1013 = vpop.f32.mrb[0].mxu0
        %v1014 = vpop.f32.mrb[0].mxu0
        %1015 = vdwg.mxu0
        %v1016 = vld [vmem:[#allocation2] sm:$0xff]
        %v1017 = vpack.c.bf16 %v1011, %v1011
        %s1018 = scalar_lea.vmem %s5, 4
        %v1019 = vld [vmem:[%s1018] sm:$0xf]
        %v1021 = vsel %vm580, %v1017, 0
        %v1024 = vsel %vm643, %v1019, 0
        %1026 = vmatprep.subr.bf16.mxu0 0
        %1027 = vmatpush1.bf16.msra.mxu0 %v1024
        %1028 = vmatprep.subr.bf16.mxu0 0
        %1029 = vmatpush1.bf16.msra.mxu0 0
        %1030 = vmatprep.subr.bf16.mxu0 0
        %1031 = vmatpush1.bf16.msra.mxu0 0
        %1032 = vmatprep.subr.bf16.mxu0 0
        %1033 = vmatpush1.bf16.msra.mxu0 0
        %1034 = vmatprep.subr.bf16.mxu0 0
        %1035 = vmatpush1.bf16.msra.mxu0 0
        %1036 = vmatprep.subr.bf16.mxu0 0
        %1037 = vmatpush1.bf16.msra.mxu0 0
        %1038 = vmatprep.subr.bf16.mxu0 0
        %1039 = vmatpush1.bf16.msra.mxu0 0
        %1040 = vmatprep.subr.bf16.mxu0 0
        %1041 = vmatpush1.bf16.msra.mxu0 0
        %1042 = vmatprep.subr.bf16.mxu0 0
        %1043 = vmatpush1.bf16.msra.mxu0 0
        %1044 = vmatprep.subr.bf16.mxu0 0
        %1045 = vmatpush1.bf16.msra.mxu0 0
        %1046 = vmatprep.subr.bf16.mxu0 0
        %1047 = vmatpush1.bf16.msra.mxu0 0
        %1048 = vmatprep.subr.bf16.mxu0 0
        %1049 = vmatpush1.bf16.msra.mxu0 0
        %1050 = vmatprep.subr.bf16.mxu0 0
        %1051 = vmatpush1.bf16.msra.mxu0 0
        %1052 = vmatprep.subr.bf16.mxu0 0
        %1053 = vmatpush1.bf16.msra.mxu0 0
        %1054 = vmatprep.subr.bf16.mxu0 0
        %1055 = vmatpush1.bf16.msra.mxu0 0
        %1056 = vmatprep.subr.bf16.mxu0 0
        %1057 = vmatpush1.bf16.msra.mxu0 0
        %1058 = vmatprep.mubr.bf16.mxu0 0
        %1059 = vmatmul.mubr.bf16.gmra.mrb[0].mxu0 %v1021
        %v1060 = vpop.f32.mrb[0].mxu0
        %v1061 = vadd.f32 0.0, %v1060
        %v1062 = vpop.f32.mrb[0].mxu0
        %v1063 = vpop.f32.mrb[0].mxu0
        %v1064 = vpop.f32.mrb[0].mxu0
        %1065 = vdwg.mxu0
        %v1066 = vadd.f32 %v1016, %v1061
        %1067 = vst.msk [vmem:[#allocation2] sm:$0xff] %vm402, %v1066
        %s1068 = scalar_lea.vmem %s2, 32
        %v1069 = vld [vmem:[%s1068] sm:$0xf]
        %v1070 = vld [vmem:[%s1068 + $0x4] sm:$0xf]
        %v1071 = vld [vmem:[%s1068 + $0x8] sm:$0xf]
        %v1072 = vld [vmem:[%s1068 + $0xc] sm:$0xf]
        %v1077 = vunpack.c.l.b16 %v1069
        %v1078 = vunpack.c.l.b16 %v1070
        %v1079 = vunpack.c.l.b16 %v1071
        %v1080 = vunpack.c.l.b16 %v1072
        %v1081 = vpack.c.b16 %v1078, %v1077
        %v1082 = vpack.c.b16 %v1080, %v1079
        %1085 = vmatprep.subr.bf16.mxu0 0
        %1086 = vmatpush1.bf16.msra.mxu0 %v1081
        %1087 = vmatprep.subr.bf16.mxu0 0
        %1088 = vmatpush1.bf16.msra.mxu0 %v1082
        %1089 = vmatprep.subr.bf16.mxu0 0
        %1090 = vmatpush1.bf16.msra.mxu0 0
        %1091 = vmatprep.subr.bf16.mxu0 0
        %1092 = vmatpush1.bf16.msra.mxu0 0
        %1093 = vmatprep.subr.bf16.mxu0 0
        %1094 = vmatpush1.bf16.msra.mxu0 0
        %1095 = vmatprep.subr.bf16.mxu0 0
        %1096 = vmatpush1.bf16.msra.mxu0 0
        %1097 = vmatprep.subr.bf16.mxu0 0
        %1098 = vmatpush1.bf16.msra.mxu0 0
        %1099 = vmatprep.subr.bf16.mxu0 0
        %1100 = vmatpush1.bf16.msra.mxu0 0
        %1101 = vmatprep.subr.bf16.mxu0 0
        %1102 = vmatpush1.bf16.msra.mxu0 0
        %1103 = vmatprep.subr.bf16.mxu0 0
        %1104 = vmatpush1.bf16.msra.mxu0 0
        %1105 = vmatprep.subr.bf16.mxu0 0
        %1106 = vmatpush1.bf16.msra.mxu0 0
        %1107 = vmatprep.subr.bf16.mxu0 0
        %1108 = vmatpush1.bf16.msra.mxu0 0
        %1109 = vmatprep.subr.bf16.mxu0 0
        %1110 = vmatpush1.bf16.msra.mxu0 0
        %1111 = vmatprep.subr.bf16.mxu0 0
        %1112 = vmatpush1.bf16.msra.mxu0 0
        %1113 = vmatprep.subr.bf16.mxu0 0
        %1114 = vmatpush1.bf16.msra.mxu0 0
        %1115 = vmatprep.subr.bf16.mxu0 0
        %1116 = vmatpush1.bf16.msra.mxu0 0
        %1117 = vmatprep.mubr.bf16.mxu0 0
        %1118 = vmatmul.mubr.bf16.gmra.mrb[0].mxu0 %v421
        %v1119 = vpop.f32.mrb[0].mxu0
        %v1120 = vadd.f32 0.0, %v1119
        %v1121 = vpop.f32.mrb[0].mxu0
        %v1122 = vpop.f32.mrb[0].mxu0
        %v1123 = vpop.f32.mrb[0].mxu0
        %1124 = vdwg.mxu0
        %s1125 = scalar_lea.vmem %s3, 32
        %v1126 = vld [vmem:[%s1125] sm:$0xf]
        %v1127 = vld [vmem:[%s1125 + $0x4] sm:$0xf]
        %v1128 = vld [vmem:[%s1125 + $0x8] sm:$0xf]
        %v1129 = vld [vmem:[%s1125 + $0xc] sm:$0xf]
        %v1134 = vunpack.c.l.b16 %v1126
        %v1135 = vunpack.c.l.b16 %v1127
        %v1136 = vunpack.c.l.b16 %v1128
        %v1137 = vunpack.c.l.b16 %v1129
        %v1138 = vpack.c.b16 %v1135, %v1134
        %v1139 = vpack.c.b16 %v1137, %v1136
        %1142 = vmatprep.subr.bf16.mxu0 0
        %1143 = vmatpush1.bf16.msra.mxu0 %v1138
        %1144 = vmatprep.subr.bf16.mxu0 0
        %1145 = vmatpush1.bf16.msra.mxu0 %v1139
        %1146 = vmatprep.subr.bf16.mxu0 0
        %1147 = vmatpush1.bf16.msra.mxu0 0
        %1148 = vmatprep.subr.bf16.mxu0 0
        %1149 = vmatpush1.bf16.msra.mxu0 0
        %1150 = vmatprep.subr.bf16.mxu0 0
        %1151 = vmatpush1.bf16.msra.mxu0 0
        %1152 = vmatprep.subr.bf16.mxu0 0
        %1153 = vmatpush1.bf16.msra.mxu0 0
        %1154 = vmatprep.subr.bf16.mxu0 0
        %1155 = vmatpush1.bf16.msra.mxu0 0
        %1156 = vmatprep.subr.bf16.mxu0 0
        %1157 = vmatpush1.bf16.msra.mxu0 0
        %1158 = vmatprep.subr.bf16.mxu0 0
        %1159 = vmatpush1.bf16.msra.mxu0 0
        %1160 = vmatprep.subr.bf16.mxu0 0
        %1161 = vmatpush1.bf16.msra.mxu0 0
        %1162 = vmatprep.subr.bf16.mxu0 0
        %1163 = vmatpush1.bf16.msra.mxu0 0
        %1164 = vmatprep.subr.bf16.mxu0 0
        %1165 = vmatpush1.bf16.msra.mxu0 0
        %1166 = vmatprep.subr.bf16.mxu0 0
        %1167 = vmatpush1.bf16.msra.mxu0 0
        %1168 = vmatprep.subr.bf16.mxu0 0
        %1169 = vmatpush1.bf16.msra.mxu0 0
        %1170 = vmatprep.subr.bf16.mxu0 0
        %1171 = vmatpush1.bf16.msra.mxu0 0
        %1172 = vmatprep.subr.bf16.mxu0 0
        %1173 = vmatpush1.bf16.msra.mxu0 0
        %1174 = vmatprep.mubr.bf16.mxu0 0
        %1175 = vmatmul.mubr.bf16.gmra.mrb[0].mxu0 %v480
        %v1176 = vpop.f32.mrb[0].mxu0
        %v1177 = vadd.f32 0.0, %v1176
        %v1178 = vpop.f32.mrb[0].mxu0
        %v1179 = vpop.f32.mrb[0].mxu0
        %v1180 = vpop.f32.mrb[0].mxu0
        %1181 = vdwg.mxu0
        %s1182 = scalar_lea.vmem %s4, 32
        %v1183 = vld [vmem:[%s1182] sm:$0xf]
        %v1184 = vld [vmem:[%s1182 + $0x4] sm:$0xf]
        %v1185 = vld [vmem:[%s1182 + $0x8] sm:$0xf]
        %v1186 = vld [vmem:[%s1182 + $0xc] sm:$0xf]
        %v1191 = vunpack.c.l.b16 %v1183
        %v1192 = vunpack.c.l.b16 %v1184
        %v1193 = vunpack.c.l.b16 %v1185
        %v1194 = vunpack.c.l.b16 %v1186
        %v1195 = vpack.c.b16 %v1192, %v1191
        %v1196 = vpack.c.b16 %v1194, %v1193
        %1199 = vmatprep.subr.bf16.mxu0 0
        %1200 = vmatpush1.bf16.msra.mxu0 %v1195
        %1201 = vmatprep.subr.bf16.mxu0 0
        %1202 = vmatpush1.bf16.msra.mxu0 %v1196
        %1203 = vmatprep.subr.bf16.mxu0 0
        %1204 = vmatpush1.bf16.msra.mxu0 0
        %1205 = vmatprep.subr.bf16.mxu0 0
        %1206 = vmatpush1.bf16.msra.mxu0 0
        %1207 = vmatprep.subr.bf16.mxu0 0
        %1208 = vmatpush1.bf16.msra.mxu0 0
        %1209 = vmatprep.subr.bf16.mxu0 0
        %1210 = vmatpush1.bf16.msra.mxu0 0
        %1211 = vmatprep.subr.bf16.mxu0 0
        %1212 = vmatpush1.bf16.msra.mxu0 0
        %1213 = vmatprep.subr.bf16.mxu0 0
        %1214 = vmatpush1.bf16.msra.mxu0 0
        %1215 = vmatprep.subr.bf16.mxu0 0
        %1216 = vmatpush1.bf16.msra.mxu0 0
        %1217 = vmatprep.subr.bf16.mxu0 0
        %1218 = vmatpush1.bf16.msra.mxu0 0
        %1219 = vmatprep.subr.bf16.mxu0 0
        %1220 = vmatpush1.bf16.msra.mxu0 0
        %1221 = vmatprep.subr.bf16.mxu0 0
        %1222 = vmatpush1.bf16.msra.mxu0 0
        %1223 = vmatprep.subr.bf16.mxu0 0
        %1224 = vmatpush1.bf16.msra.mxu0 0
        %1225 = vmatprep.subr.bf16.mxu0 0
        %1226 = vmatpush1.bf16.msra.mxu0 0
        %1227 = vmatprep.subr.bf16.mxu0 0
        %1228 = vmatpush1.bf16.msra.mxu0 0
        %1229 = vmatprep.subr.bf16.mxu0 0
        %1230 = vmatpush1.bf16.msra.mxu0 0
        %1231 = vmatprep.mubr.bf16.mxu0 0
        %1232 = vmatmul.mubr.bf16.gmra.mrb[0].mxu0 %v480
        %v1233 = vpop.f32.mrb[0].mxu0
        %v1234 = vadd.f32 0.0, %v1233
        %v1235 = vpop.f32.mrb[0].mxu0
        %v1236 = vpop.f32.mrb[0].mxu0
        %v1237 = vpop.f32.mrb[0].mxu0
        %1238 = vdwg.mxu0
        %v1239 = vpack.c.bf16 %v1120, %v1120
        %v1240 = vpack.c.bf16 %v1177, %v1177
        %v1242 = vsel %vm580, %v1239, 0
        %v1245 = vsel %vm580, %v1240, 0
        %1247 = vmatprep.subr.bf16.mxu0 0
        %1248 = vmatpush1.bf16.xpose.msra.mxu0 %v1245
        %1249 = vmatprep.subr.bf16.mxu0 0
        %1250 = vmatpush1.bf16.xpose.msra.mxu0 0
        %1251 = vmatprep.subr.bf16.mxu0 0
        %1252 = vmatpush1.bf16.xpose.msra.mxu0 0
        %1253 = vmatprep.subr.bf16.mxu0 0
        %1254 = vmatpush1.bf16.xpose.msra.mxu0 0
        %1255 = vmatprep.subr.bf16.mxu0 0
        %1256 = vmatpush1.bf16.xpose.msra.mxu0 0
        %1257 = vmatprep.subr.bf16.mxu0 0
        %1258 = vmatpush1.bf16.xpose.msra.mxu0 0
        %1259 = vmatprep.subr.bf16.mxu0 0
        %1260 = vmatpush1.bf16.xpose.msra.mxu0 0
        %1261 = vmatprep.subr.bf16.mxu0 0
        %1262 = vmatpush1.bf16.xpose.msra.mxu0 0
        %1263 = vmatprep.subr.bf16.mxu0 0
        %1264 = vmatpush1.bf16.xpose.msra.mxu0 0
        %1265 = vmatprep.subr.bf16.mxu0 0
        %1266 = vmatpush1.bf16.xpose.msra.mxu0 0
        %1267 = vmatprep.subr.bf16.mxu0 0
        %1268 = vmatpush1.bf16.xpose.msra.mxu0 0
        %1269 = vmatprep.subr.bf16.mxu0 0
        %1270 = vmatpush1.bf16.xpose.msra.mxu0 0
        %1271 = vmatprep.subr.bf16.mxu0 0
        %1272 = vmatpush1.bf16.xpose.msra.mxu0 0
        %1273 = vmatprep.subr.bf16.mxu0 0
        %1274 = vmatpush1.bf16.xpose.msra.mxu0 0
        %1275 = vmatprep.subr.bf16.mxu0 0
        %1276 = vmatpush1.bf16.xpose.msra.mxu0 0
        %1277 = vmatprep.subr.bf16.mxu0 0
        %1278 = vmatpush1.bf16.xpose.msra.mxu0 0
        %1279 = vmatprep.mubr.bf16.mxu0 0
        %1280 = vmatmul.mubr.bf16.gmra.mrb[0].mxu0 %v1242
        %v1281 = vpop.f32.mrb[0].mxu0
        %v1282 = vadd.f32 0.0, %v1281
        %v1283 = vpop.f32.mrb[0].mxu0
        %v1284 = vpop.f32.mrb[0].mxu0
        %v1285 = vpop.f32.mrb[0].mxu0
        %1286 = vdwg.mxu0
        %v1287 = vsel %vm580, %v1282, -inf
        %1288 = vmax.xlane.f32.xlu0 %v1287
        %v1289 = vpop.xlane.xlu0 %1288
        %v1290 = vsub.f32 %v1282, %v1289
        %v1291 = vmul.f32 %v1290, 1.442695
        %v1292 = vpow.pop %v1291
        %v1293 = vsel %vm580, %v1292, 0.0
        %1294 = vadd.xlane.f32.xlu0 %v1293
        %v1295 = vpop.xlane.xlu0 %1294
        %v1296 = vrcp.pop %v1295
        %v1297 = vmul.f32 %v1292, %v1296
        %v1298 = vpack.c.bf16 %v1297, %v1297
        %v1299 = vpack.c.bf16 %v1234, %v1234
        %v1301 = vsel %vm580, %v1298, 0
        %v1304 = vsel %vm643, %v1299, 0
        %1306 = vmatprep.subr.bf16.mxu0 0
        %1307 = vmatpush1.bf16.msra.mxu0 %v1304
        %1308 = vmatprep.subr.bf16.mxu0 0
        %1309 = vmatpush1.bf16.msra.mxu0 0
        %1310 = vmatprep.subr.bf16.mxu0 0
        %1311 = vmatpush1.bf16.msra.mxu0 0
        %1312 = vmatprep.subr.bf16.mxu0 0
        %1313 = vmatpush1.bf16.msra.mxu0 0
        %1314 = vmatprep.subr.bf16.mxu0 0
        %1315 = vmatpush1.bf16.msra.mxu0 0
        %1316 = vmatprep.subr.bf16.mxu0 0
        %1317 = vmatpush1.bf16.msra.mxu0 0
        %1318 = vmatprep.subr.bf16.mxu0 0
        %1319 = vmatpush1.bf16.msra.mxu0 0
        %1320 = vmatprep.subr.bf16.mxu0 0
        %1321 = vmatpush1.bf16.msra.mxu0 0
        %1322 = vmatprep.subr.bf16.mxu0 0
        %1323 = vmatpush1.bf16.msra.mxu0 0
        %1324 = vmatprep.subr.bf16.mxu0 0
        %1325 = vmatpush1.bf16.msra.mxu0 0
        %1326 = vmatprep.subr.bf16.mxu0 0
        %1327 = vmatpush1.bf16.msra.mxu0 0
        %1328 = vmatprep.subr.bf16.mxu0 0
        %1329 = vmatpush1.bf16.msra.mxu0 0
        %1330 = vmatprep.subr.bf16.mxu0 0
        %1331 = vmatpush1.bf16.msra.mxu0 0
        %1332 = vmatprep.subr.bf16.mxu0 0
        %1333 = vmatpush1.bf16.msra.mxu0 0
        %1334 = vmatprep.subr.bf16.mxu0 0
        %1335 = vmatpush1.bf16.msra.mxu0 0
        %1336 = vmatprep.subr.bf16.mxu0 0
        %1337 = vmatpush1.bf16.msra.mxu0 0
        %1338 = vmatprep.mubr.bf16.mxu0 0
        %1339 = vmatmul.mubr.bf16.gmra.mrb[0].mxu0 %v1301
        %v1340 = vpop.f32.mrb[0].mxu0
        %v1341 = vadd.f32 0.0, %v1340
        %v1342 = vpop.f32.mrb[0].mxu0
        %v1343 = vpop.f32.mrb[0].mxu0
        %v1344 = vpop.f32.mrb[0].mxu0
        %1345 = vdwg.mxu0
        %v1346 = vld [vmem:[#allocation2] sm:$0xff]
        %v1347 = vpack.c.bf16 %v1341, %v1341
        %s1348 = scalar_lea.vmem %s5, 8
        %v1349 = vld [vmem:[%s1348] sm:$0xf]
        %v1351 = vsel %vm580, %v1347, 0
        %v1354 = vsel %vm643, %v1349, 0
        %1356 = vmatprep.subr.bf16.mxu0 0
        %1357 = vmatpush1.bf16.msra.mxu0 %v1354
        %1358 = vmatprep.subr.bf16.mxu0 0
        %1359 = vmatpush1.bf16.msra.mxu0 0
        %1360 = vmatprep.subr.bf16.mxu0 0
        %1361 = vmatpush1.bf16.msra.mxu0 0
        %1362 = vmatprep.subr.bf16.mxu0 0
        %1363 = vmatpush1.bf16.msra.mxu0 0
        %1364 = vmatprep.subr.bf16.mxu0 0
        %1365 = vmatpush1.bf16.msra.mxu0 0
        %1366 = vmatprep.subr.bf16.mxu0 0
        %1367 = vmatpush1.bf16.msra.mxu0 0
        %1368 = vmatprep.subr.bf16.mxu0 0
        %1369 = vmatpush1.bf16.msra.mxu0 0
        %1370 = vmatprep.subr.bf16.mxu0 0
        %1371 = vmatpush1.bf16.msra.mxu0 0
        %1372 = vmatprep.subr.bf16.mxu0 0
        %1373 = vmatpush1.bf16.msra.mxu0 0
        %1374 = vmatprep.subr.bf16.mxu0 0
        %1375 = vmatpush1.bf16.msra.mxu0 0
        %1376 = vmatprep.subr.bf16.mxu0 0
        %1377 = vmatpush1.bf16.msra.mxu0 0
        %1378 = vmatprep.subr.bf16.mxu0 0
        %1379 = vmatpush1.bf16.msra.mxu0 0
        %1380 = vmatprep.subr.bf16.mxu0 0
        %1381 = vmatpush1.bf16.msra.mxu0 0
        %1382 = vmatprep.subr.bf16.mxu0 0
        %1383 = vmatpush1.bf16.msra.mxu0 0
        %1384 = vmatprep.subr.bf16.mxu0 0
        %1385 = vmatpush1.bf16.msra.mxu0 0
        %1386 = vmatprep.subr.bf16.mxu0 0
        %1387 = vmatpush1.bf16.msra.mxu0 0
        %1388 = vmatprep.mubr.bf16.mxu0 0
        %1389 = vmatmul.mubr.bf16.gmra.mrb[0].mxu0 %v1351
        %v1390 = vpop.f32.mrb[0].mxu0
        %v1391 = vadd.f32 0.0, %v1390
        %v1392 = vpop.f32.mrb[0].mxu0
        %v1393 = vpop.f32.mrb[0].mxu0
        %v1394 = vpop.f32.mrb[0].mxu0
        %1395 = vdwg.mxu0
        %v1396 = vadd.f32 %v1346, %v1391
        %1397 = vst.msk [vmem:[#allocation2] sm:$0xff] %vm402, %v1396
        %s1398 = scalar_lea.vmem %s2, 48
        %v1399 = vld [vmem:[%s1398] sm:$0xf]
        %v1400 = vld [vmem:[%s1398 + $0x4] sm:$0xf]
        %v1401 = vld [vmem:[%s1398 + $0x8] sm:$0xf]
        %v1402 = vld [vmem:[%s1398 + $0xc] sm:$0xf]
        %v1407 = vunpack.c.l.b16 %v1399
        %v1408 = vunpack.c.l.b16 %v1400
        %v1409 = vunpack.c.l.b16 %v1401
        %v1410 = vunpack.c.l.b16 %v1402
        %v1411 = vpack.c.b16 %v1408, %v1407
        %v1412 = vpack.c.b16 %v1410, %v1409
        %1415 = vmatprep.subr.bf16.mxu0 0
        %1416 = vmatpush1.bf16.msra.mxu0 %v1411
        %1417 = vmatprep.subr.bf16.mxu0 0
        %1418 = vmatpush1.bf16.msra.mxu0 %v1412
        %1419 = vmatprep.subr.bf16.mxu0 0
        %1420 = vmatpush1.bf16.msra.mxu0 0
        %1421 = vmatprep.subr.bf16.mxu0 0
        %1422 = vmatpush1.bf16.msra.mxu0 0
        %1423 = vmatprep.subr.bf16.mxu0 0
        %1424 = vmatpush1.bf16.msra.mxu0 0
        %1425 = vmatprep.subr.bf16.mxu0 0
        %1426 = vmatpush1.bf16.msra.mxu0 0
        %1427 = vmatprep.subr.bf16.mxu0 0
        %1428 = vmatpush1.bf16.msra.mxu0 0
        %1429 = vmatprep.subr.bf16.mxu0 0
        %1430 = vmatpush1.bf16.msra.mxu0 0
        %1431 = vmatprep.subr.bf16.mxu0 0
        %1432 = vmatpush1.bf16.msra.mxu0 0
        %1433 = vmatprep.subr.bf16.mxu0 0
        %1434 = vmatpush1.bf16.msra.mxu0 0
        %1435 = vmatprep.subr.bf16.mxu0 0
        %1436 = vmatpush1.bf16.msra.mxu0 0
        %1437 = vmatprep.subr.bf16.mxu0 0
        %1438 = vmatpush1.bf16.msra.mxu0 0
        %1439 = vmatprep.subr.bf16.mxu0 0
        %1440 = vmatpush1.bf16.msra.mxu0 0
        %1441 = vmatprep.subr.bf16.mxu0 0
        %1442 = vmatpush1.bf16.msra.mxu0 0
        %1443 = vmatprep.subr.bf16.mxu0 0
        %1444 = vmatpush1.bf16.msra.mxu0 0
        %1445 = vmatprep.subr.bf16.mxu0 0
        %1446 = vmatpush1.bf16.msra.mxu0 0
        %1447 = vmatprep.mubr.bf16.mxu0 0
        %1448 = vmatmul.mubr.bf16.gmra.mrb[0].mxu0 %v421
        %v1449 = vpop.f32.mrb[0].mxu0
        %v1450 = vadd.f32 0.0, %v1449
        %v1451 = vpop.f32.mrb[0].mxu0
        %v1452 = vpop.f32.mrb[0].mxu0
        %v1453 = vpop.f32.mrb[0].mxu0
        %1454 = vdwg.mxu0
        %s1455 = scalar_lea.vmem %s3, 48
        %v1456 = vld [vmem:[%s1455] sm:$0xf]
        %v1457 = vld [vmem:[%s1455 + $0x4] sm:$0xf]
        %v1458 = vld [vmem:[%s1455 + $0x8] sm:$0xf]
        %v1459 = vld [vmem:[%s1455 + $0xc] sm:$0xf]
        %v1464 = vunpack.c.l.b16 %v1456
        %v1465 = vunpack.c.l.b16 %v1457
        %v1466 = vunpack.c.l.b16 %v1458
        %v1467 = vunpack.c.l.b16 %v1459
        %v1468 = vpack.c.b16 %v1465, %v1464
        %v1469 = vpack.c.b16 %v1467, %v1466
        %1472 = vmatprep.subr.bf16.mxu0 0
        %1473 = vmatpush1.bf16.msra.mxu0 %v1468
        %1474 = vmatprep.subr.bf16.mxu0 0
        %1475 = vmatpush1.bf16.msra.mxu0 %v1469
        %1476 = vmatprep.subr.bf16.mxu0 0
        %1477 = vmatpush1.bf16.msra.mxu0 0
        %1478 = vmatprep.subr.bf16.mxu0 0
        %1479 = vmatpush1.bf16.msra.mxu0 0
        %1480 = vmatprep.subr.bf16.mxu0 0
        %1481 = vmatpush1.bf16.msra.mxu0 0
        %1482 = vmatprep.subr.bf16.mxu0 0
        %1483 = vmatpush1.bf16.msra.mxu0 0
        %1484 = vmatprep.subr.bf16.mxu0 0
        %1485 = vmatpush1.bf16.msra.mxu0 0
        %1486 = vmatprep.subr.bf16.mxu0 0
        %1487 = vmatpush1.bf16.msra.mxu0 0
        %1488 = vmatprep.subr.bf16.mxu0 0
        %1489 = vmatpush1.bf16.msra.mxu0 0
        %1490 = vmatprep.subr.bf16.mxu0 0
        %1491 = vmatpush1.bf16.msra.mxu0 0
        %1492 = vmatprep.subr.bf16.mxu0 0
        %1493 = vmatpush1.bf16.msra.mxu0 0
        %1494 = vmatprep.subr.bf16.mxu0 0
        %1495 = vmatpush1.bf16.msra.mxu0 0
        %1496 = vmatprep.subr.bf16.mxu0 0
        %1497 = vmatpush1.bf16.msra.mxu0 0
        %1498 = vmatprep.subr.bf16.mxu0 0
        %1499 = vmatpush1.bf16.msra.mxu0 0
        %1500 = vmatprep.subr.bf16.mxu0 0
        %1501 = vmatpush1.bf16.msra.mxu0 0
        %1502 = vmatprep.subr.bf16.mxu0 0
        %1503 = vmatpush1.bf16.msra.mxu0 0
        %1504 = vmatprep.mubr.bf16.mxu0 0
        %1505 = vmatmul.mubr.bf16.gmra.mrb[0].mxu0 %v480
        %v1506 = vpop.f32.mrb[0].mxu0
        %v1507 = vadd.f32 0.0, %v1506
        %v1508 = vpop.f32.mrb[0].mxu0
        %v1509 = vpop.f32.mrb[0].mxu0
        %v1510 = vpop.f32.mrb[0].mxu0
        %1511 = vdwg.mxu0
        %s1512 = scalar_lea.vmem %s4, 48
        %v1513 = vld [vmem:[%s1512] sm:$0xf]
        %v1514 = vld [vmem:[%s1512 + $0x4] sm:$0xf]
        %v1515 = vld [vmem:[%s1512 + $0x8] sm:$0xf]
        %v1516 = vld [vmem:[%s1512 + $0xc] sm:$0xf]
        %v1521 = vunpack.c.l.b16 %v1513
        %v1522 = vunpack.c.l.b16 %v1514
        %v1523 = vunpack.c.l.b16 %v1515
        %v1524 = vunpack.c.l.b16 %v1516
        %v1525 = vpack.c.b16 %v1522, %v1521
        %v1526 = vpack.c.b16 %v1524, %v1523
        %1529 = vmatprep.subr.bf16.mxu0 0
        %1530 = vmatpush1.bf16.msra.mxu0 %v1525
        %1531 = vmatprep.subr.bf16.mxu0 0
        %1532 = vmatpush1.bf16.msra.mxu0 %v1526
        %1533 = vmatprep.subr.bf16.mxu0 0
        %1534 = vmatpush1.bf16.msra.mxu0 0
        %1535 = vmatprep.subr.bf16.mxu0 0
        %1536 = vmatpush1.bf16.msra.mxu0 0
        %1537 = vmatprep.subr.bf16.mxu0 0
        %1538 = vmatpush1.bf16.msra.mxu0 0
        %1539 = vmatprep.subr.bf16.mxu0 0
        %1540 = vmatpush1.bf16.msra.mxu0 0
        %1541 = vmatprep.subr.bf16.mxu0 0
        %1542 = vmatpush1.bf16.msra.mxu0 0
        %1543 = vmatprep.subr.bf16.mxu0 0
        %1544 = vmatpush1.bf16.msra.mxu0 0
        %1545 = vmatprep.subr.bf16.mxu0 0
        %1546 = vmatpush1.bf16.msra.mxu0 0
        %1547 = vmatprep.subr.bf16.mxu0 0
        %1548 = vmatpush1.bf16.msra.mxu0 0
        %1549 = vmatprep.subr.bf16.mxu0 0
        %1550 = vmatpush1.bf16.msra.mxu0 0
        %1551 = vmatprep.subr.bf16.mxu0 0
        %1552 = vmatpush1.bf16.msra.mxu0 0
        %1553 = vmatprep.subr.bf16.mxu0 0
        %1554 = vmatpush1.bf16.msra.mxu0 0
        %1555 = vmatprep.subr.bf16.mxu0 0
        %1556 = vmatpush1.bf16.msra.mxu0 0
        %1557 = vmatprep.subr.bf16.mxu0 0
        %1558 = vmatpush1.bf16.msra.mxu0 0
        %1559 = vmatprep.subr.bf16.mxu0 0
        %1560 = vmatpush1.bf16.msra.mxu0 0
        %1561 = vmatprep.mubr.bf16.mxu0 0
        %1562 = vmatmul.mubr.bf16.gmra.mrb[0].mxu0 %v480
        %v1563 = vpop.f32.mrb[0].mxu0
        %v1564 = vadd.f32 0.0, %v1563
        %v1565 = vpop.f32.mrb[0].mxu0
        %v1566 = vpop.f32.mrb[0].mxu0
        %v1567 = vpop.f32.mrb[0].mxu0
        %1568 = vdwg.mxu0
        %v1569 = vpack.c.bf16 %v1450, %v1450
        %v1570 = vpack.c.bf16 %v1507, %v1507
        %v1572 = vsel %vm580, %v1569, 0
        %v1575 = vsel %vm580, %v1570, 0
        %1577 = vmatprep.subr.bf16.mxu0 0
        %1578 = vmatpush1.bf16.xpose.msra.mxu0 %v1575
        %1579 = vmatprep.subr.bf16.mxu0 0
        %1580 = vmatpush1.bf16.xpose.msra.mxu0 0
        %1581 = vmatprep.subr.bf16.mxu0 0
        %1582 = vmatpush1.bf16.xpose.msra.mxu0 0
        %1583 = vmatprep.subr.bf16.mxu0 0
        %1584 = vmatpush1.bf16.xpose.msra.mxu0 0
        %1585 = vmatprep.subr.bf16.mxu0 0
        %1586 = vmatpush1.bf16.xpose.msra.mxu0 0
        %1587 = vmatprep.subr.bf16.mxu0 0
        %1588 = vmatpush1.bf16.xpose.msra.mxu0 0
        %1589 = vmatprep.subr.bf16.mxu0 0
        %1590 = vmatpush1.bf16.xpose.msra.mxu0 0
        %1591 = vmatprep.subr.bf16.mxu0 0
        %1592 = vmatpush1.bf16.xpose.msra.mxu0 0
        %1593 = vmatprep.subr.bf16.mxu0 0
        %1594 = vmatpush1.bf16.xpose.msra.mxu0 0
        %1595 = vmatprep.subr.bf16.mxu0 0
        %1596 = vmatpush1.bf16.xpose.msra.mxu0 0
        %1597 = vmatprep.subr.bf16.mxu0 0
        %1598 = vmatpush1.bf16.xpose.msra.mxu0 0
        %1599 = vmatprep.subr.bf16.mxu0 0
        %1600 = vmatpush1.bf16.xpose.msra.mxu0 0
        %1601 = vmatprep.subr.bf16.mxu0 0
        %1602 = vmatpush1.bf16.xpose.msra.mxu0 0
        %1603 = vmatprep.subr.bf16.mxu0 0
        %1604 = vmatpush1.bf16.xpose.msra.mxu0 0
        %1605 = vmatprep.subr.bf16.mxu0 0
        %1606 = vmatpush1.bf16.xpose.msra.mxu0 0
        %1607 = vmatprep.subr.bf16.mxu0 0
        %1608 = vmatpush1.bf16.xpose.msra.mxu0 0
        %1609 = vmatprep.mubr.bf16.mxu0 0
        %1610 = vmatmul.mubr.bf16.gmra.mrb[0].mxu0 %v1572
        %v1611 = vpop.f32.mrb[0].mxu0
        %v1612 = vadd.f32 0.0, %v1611
        %v1613 = vpop.f32.mrb[0].mxu0
        %v1614 = vpop.f32.mrb[0].mxu0
        %v1615 = vpop.f32.mrb[0].mxu0
        %1616 = vdwg.mxu0
        %v1617 = vsel %vm580, %v1612, -inf
        %1618 = vmax.xlane.f32.xlu0 %v1617
        %v1619 = vpop.xlane.xlu0 %1618
        %v1620 = vsub.f32 %v1612, %v1619
        %v1621 = vmul.f32 %v1620, 1.442695
        %v1622 = vpow.pop %v1621
        %v1623 = vsel %vm580, %v1622, 0.0
        %1624 = vadd.xlane.f32.xlu0 %v1623
        %v1625 = vpop.xlane.xlu0 %1624
        %v1626 = vrcp.pop %v1625
        %v1627 = vmul.f32 %v1622, %v1626
        %v1628 = vpack.c.bf16 %v1627, %v1627
        %v1629 = vpack.c.bf16 %v1564, %v1564
        %v1631 = vsel %vm580, %v1628, 0
        %v1634 = vsel %vm643, %v1629, 0
        %1636 = vmatprep.subr.bf16.mxu0 0
        %1637 = vmatpush1.bf16.msra.mxu0 %v1634
        %1638 = vmatprep.subr.bf16.mxu0 0
        %1639 = vmatpush1.bf16.msra.mxu0 0
        %1640 = vmatprep.subr.bf16.mxu0 0
        %1641 = vmatpush1.bf16.msra.mxu0 0
        %1642 = vmatprep.subr.bf16.mxu0 0
        %1643 = vmatpush1.bf16.msra.mxu0 0
        %1644 = vmatprep.subr.bf16.mxu0 0
        %1645 = vmatpush1.bf16.msra.mxu0 0
        %1646 = vmatprep.subr.bf16.mxu0 0
        %1647 = vmatpush1.bf16.msra.mxu0 0
        %1648 = vmatprep.subr.bf16.mxu0 0
        %1649 = vmatpush1.bf16.msra.mxu0 0
        %1650 = vmatprep.subr.bf16.mxu0 0
        %1651 = vmatpush1.bf16.msra.mxu0 0
        %1652 = vmatprep.subr.bf16.mxu0 0
        %1653 = vmatpush1.bf16.msra.mxu0 0
        %1654 = vmatprep.subr.bf16.mxu0 0
        %1655 = vmatpush1.bf16.msra.mxu0 0
        %1656 = vmatprep.subr.bf16.mxu0 0
        %1657 = vmatpush1.bf16.msra.mxu0 0
        %1658 = vmatprep.subr.bf16.mxu0 0
        %1659 = vmatpush1.bf16.msra.mxu0 0
        %1660 = vmatprep.subr.bf16.mxu0 0
        %1661 = vmatpush1.bf16.msra.mxu0 0
        %1662 = vmatprep.subr.bf16.mxu0 0
        %1663 = vmatpush1.bf16.msra.mxu0 0
        %1664 = vmatprep.subr.bf16.mxu0 0
        %1665 = vmatpush1.bf16.msra.mxu0 0
        %1666 = vmatprep.subr.bf16.mxu0 0
        %1667 = vmatpush1.bf16.msra.mxu0 0
        %1668 = vmatprep.mubr.bf16.mxu0 0
        %1669 = vmatmul.mubr.bf16.gmra.mrb[0].mxu0 %v1631
        %v1670 = vpop.f32.mrb[0].mxu0
        %v1671 = vadd.f32 0.0, %v1670
        %v1672 = vpop.f32.mrb[0].mxu0
        %v1673 = vpop.f32.mrb[0].mxu0
        %v1674 = vpop.f32.mrb[0].mxu0
        %1675 = vdwg.mxu0
        %v1676 = vld [vmem:[#allocation2] sm:$0xff]
        %v1677 = vpack.c.bf16 %v1671, %v1671
        %s1678 = scalar_lea.vmem %s5, 12
        %v1679 = vld [vmem:[%s1678] sm:$0xf]
        %v1681 = vsel %vm580, %v1677, 0
        %v1684 = vsel %vm643, %v1679, 0
        %1686 = vmatprep.subr.bf16.mxu0 0
        %1687 = vmatpush1.bf16.msra.mxu0 %v1684
        %1688 = vmatprep.subr.bf16.mxu0 0
        %1689 = vmatpush1.bf16.msra.mxu0 0
        %1690 = vmatprep.subr.bf16.mxu0 0
        %1691 = vmatpush1.bf16.msra.mxu0 0
        %1692 = vmatprep.subr.bf16.mxu0 0
        %1693 = vmatpush1.bf16.msra.mxu0 0
        %1694 = vmatprep.subr.bf16.mxu0 0
        %1695 = vmatpush1.bf16.msra.mxu0 0
        %1696 = vmatprep.subr.bf16.mxu0 0
        %1697 = vmatpush1.bf16.msra.mxu0 0
        %1698 = vmatprep.subr.bf16.mxu0 0
        %1699 = vmatpush1.bf16.msra.mxu0 0
        %1700 = vmatprep.subr.bf16.mxu0 0
        %1701 = vmatpush1.bf16.msra.mxu0 0
        %1702 = vmatprep.subr.bf16.mxu0 0
        %1703 = vmatpush1.bf16.msra.mxu0 0
        %1704 = vmatprep.subr.bf16.mxu0 0
        %1705 = vmatpush1.bf16.msra.mxu0 0
        %1706 = vmatprep.subr.bf16.mxu0 0
        %1707 = vmatpush1.bf16.msra.mxu0 0
        %1708 = vmatprep.subr.bf16.mxu0 0
        %1709 = vmatpush1.bf16.msra.mxu0 0
        %1710 = vmatprep.subr.bf16.mxu0 0
        %1711 = vmatpush1.bf16.msra.mxu0 0
        %1712 = vmatprep.subr.bf16.mxu0 0
        %1713 = vmatpush1.bf16.msra.mxu0 0
        %1714 = vmatprep.subr.bf16.mxu0 0
        %1715 = vmatpush1.bf16.msra.mxu0 0
        %1716 = vmatprep.subr.bf16.mxu0 0
        %1717 = vmatpush1.bf16.msra.mxu0 0
        %1718 = vmatprep.mubr.bf16.mxu0 0
        %1719 = vmatmul.mubr.bf16.gmra.mrb[0].mxu0 %v1681
        %v1720 = vpop.f32.mrb[0].mxu0
        %v1721 = vadd.f32 0.0, %v1720
        %v1722 = vpop.f32.mrb[0].mxu0
        %v1723 = vpop.f32.mrb[0].mxu0
        %v1724 = vpop.f32.mrb[0].mxu0
        %1725 = vdwg.mxu0
        %v1726 = vadd.f32 %v1676, %v1721
        %1727 = vst.msk [vmem:[#allocation2] sm:$0xff] %vm402, %v1726
        %v1728 = vld [vmem:[%s9] sm:$0xff]
        %v1729 = vld [vmem:[#allocation2] sm:$0xff]
        %v1730 = vlaneseq
        %v1731 = vshrl.u32 %v1730, 7
        %v1732 = vsub.s32 0, %v1731
        %v1733 = vrot.slane %v1728, %v1732
        %v1734 = vadd.f32 %v1729, %v1733
        %v1735 = vadd.f32 %v398, %v1734
        %v1736 = vsel %vm402, %v1735, 0.0
        %1737 = vadd.xlane.f32.xlu0 %v1736
        %v1738 = vpop.xlane.xlu0 %1737
        %v1739 = vrcp.pop 32.0
        %v1740 = vmul.f32 %v1738, %v1739
        %v1741 = vsub.f32 %v1735, %v1740
        %v1742 = vmul.f32 %v1741, %v1741
        %v1743 = vsel %vm402, %v1742, 0.0
        %1744 = vadd.xlane.f32.xlu0 %v1743
        %v1745 = vpop.xlane.xlu0 %1744
        %v1746 = vmul.f32 %v1745, %v1739
        %v1747 = vadd.f32 %v1746, 1e-05
        %v1748 = vrsqrt.pop %v1747
        %v1749 = vmul.f32 %v1741, %v1748
        %v1750 = vlaneseq
        %v1751 = vshrl.u32 %v1750, 7
        %v1752 = vsub.s32 2, %v1751
        %v1753 = vrot.slane %v1728, %v1752
        %v1754 = vmul.f32 %v1749, %v1753
        %v1755 = vlaneseq
        %v1756 = vshrl.u32 %v1755, 7
        %v1757 = vsub.s32 3, %v1756
        %v1758 = vrot.slane %v1728, %v1757
        %v1759 = vadd.f32 %v1754, %v1758
        %v1760 = vpack.c.bf16 %v1759, %v1759
        %v1761 = vld [vmem:[%s6] sm:$0xf]
        %v1762 = vld [vmem:[%s6 + $0x4] sm:$0xf]
        %v1763 = vld [vmem:[%s6 + $0x8] sm:$0xf]
        %v1764 = vld [vmem:[%s6 + $0xc] sm:$0xf]
        %v1765 = vld [vmem:[%s8] sm:$0x1]
        %v1767 = vlaneseq
        %v1768 = vshrl.u32 %v1767, 7
        %v1769 = vsub.s32 0, %v1768
        %v1770 = vrot.slane %v1765, %v1769
        %v1776 = vunpack.c.l.b16 %v1761
        %v1777 = vunpack.c.l.b16 %v1762
        %v1778 = vunpack.c.l.b16 %v1763
        %v1779 = vunpack.c.l.b16 %v1764
        %v1780 = vpack.c.b16 %v1777, %v1776
        %v1781 = vpack.c.b16 %v1779, %v1778
        %v1785 = vsel %vm402, %v1760, 0
        %1787 = vmatprep.subr.bf16.mxu0 0
        %1788 = vmatpush1.bf16.msra.mxu0 %v1780
        %1789 = vmatprep.subr.bf16.mxu0 0
        %1790 = vmatpush1.bf16.msra.mxu0 %v1781
        %1791 = vmatprep.subr.bf16.mxu0 0
        %1792 = vmatpush1.bf16.msra.mxu0 0
        %1793 = vmatprep.subr.bf16.mxu0 0
        %1794 = vmatpush1.bf16.msra.mxu0 0
        %1795 = vmatprep.subr.bf16.mxu0 0
        %1796 = vmatpush1.bf16.msra.mxu0 0
        %1797 = vmatprep.subr.bf16.mxu0 0
        %1798 = vmatpush1.bf16.msra.mxu0 0
        %1799 = vmatprep.subr.bf16.mxu0 0
        %1800 = vmatpush1.bf16.msra.mxu0 0
        %1801 = vmatprep.subr.bf16.mxu0 0
        %1802 = vmatpush1.bf16.msra.mxu0 0
        %1803 = vmatprep.subr.bf16.mxu0 0
        %1804 = vmatpush1.bf16.msra.mxu0 0
        %1805 = vmatprep.subr.bf16.mxu0 0
        %1806 = vmatpush1.bf16.msra.mxu0 0
        %1807 = vmatprep.subr.bf16.mxu0 0
        %1808 = vmatpush1.bf16.msra.mxu0 0
        %1809 = vmatprep.subr.bf16.mxu0 0
        %1810 = vmatpush1.bf16.msra.mxu0 0
        %1811 = vmatprep.subr.bf16.mxu0 0
        %1812 = vmatpush1.bf16.msra.mxu0 0
        %1813 = vmatprep.subr.bf16.mxu0 0
        %1814 = vmatpush1.bf16.msra.mxu0 0
        %1815 = vmatprep.subr.bf16.mxu0 0
        %1816 = vmatpush1.bf16.msra.mxu0 0
        %1817 = vmatprep.subr.bf16.mxu0 0
        %1818 = vmatpush1.bf16.msra.mxu0 0
        %1819 = vmatprep.mubr.bf16.mxu0 0
        %1820 = vmatmul.mubr.bf16.gmra.mrb[0].mxu0 %v1785
        %v1821 = vpop.f32.mrb[0].mxu0
        %v1822 = vadd.f32 %v1770, %v1821
        %v1823 = vpop.f32.mrb[0].mxu0
        %v1824 = vpop.f32.mrb[0].mxu0
        %v1825 = vpop.f32.mrb[0].mxu0
        %1826 = vdwg.mxu0
        %v1827 = vmul.f32 %v1822, 0.5
        %v1828 = vmul.f32 %v1822, 0.70710677
        %v1829 = vand.u32 2147483647, %v1828
        %v1830 = vmul.f32 %v1829, 0.3275911
        %v1831 = vadd.f32 %v1830, 1.0
        %v1832 = vrcp.pop %v1831
        %v1833 = vmul.f32 1.0, %v1832
        %v1834 = vmul.f32 %v1833, 1.0614054
        %v1835 = vadd.f32 %v1834, -1.4531521
        %v1836 = vmul.f32 %v1835, %v1833
        %v1837 = vadd.f32 %v1836, 1.4214138
        %v1838 = vmul.f32 %v1837, %v1833
        %v1839 = vadd.f32 %v1838, -0.28449672
        %v1840 = vmul.f32 %v1839, %v1833
        %v1841 = vadd.f32 %v1840, 0.2548296
        %v1842 = vmul.f32 %v1841, %v1833
        %v1843 = vsub.f32 0.0, %v1829
        %v1844 = vmul.f32 %v1843, %v1829
        %v1845 = vmul.f32 %v1844, 1.442695
        %v1846 = vpow.pop %v1845
        %v1847 = vmul.f32 %v1842, %v1846
        %v1848 = vsub.f32 1.0, %v1847
        %vm1849 = vcmp.ge.f32.partialorder %v1828, 0.0
        %v1850 = vsub.f32 0.0, %v1848
        %v1851 = vsel %vm1849, %v1848, %v1850
        %v1852 = vadd.f32 %v1851, 1.0
        %v1853 = vmul.f32 %v1827, %v1852
        %v1854 = vpack.c.bf16 %v1853, %v1853
        %v1855 = vld [vmem:[%s7] sm:$0xf]
        %v1856 = vld [vmem:[%s7 + $0x4] sm:$0xf]
        %v1857 = vld [vmem:[%s7 + $0x8] sm:$0xf]
        %v1858 = vld [vmem:[%s7 + $0xc] sm:$0xf]
        %v1859 = vld [vmem:[%s7 + $0x10] sm:$0xf]
        %v1860 = vld [vmem:[%s7 + $0x14] sm:$0xf]
        %v1861 = vld [vmem:[%s7 + $0x18] sm:$0xf]
        %v1862 = vld [vmem:[%s7 + $0x1c] sm:$0xf]
        %v1863 = vlaneseq
        %v1864 = vshrl.u32 %v1863, 7
        %v1865 = vsub.s32 1, %v1864
        %v1866 = vrot.slane %v1728, %v1865
        %v1875 = vunpack.c.l.b16 %v1855
        %v1876 = vunpack.c.l.b16 %v1856
        %v1877 = vunpack.c.l.b16 %v1857
        %v1878 = vunpack.c.l.b16 %v1858
        %v1879 = vunpack.c.l.b16 %v1859
        %v1880 = vunpack.c.l.b16 %v1860
        %v1881 = vunpack.c.l.b16 %v1861
        %v1882 = vunpack.c.l.b16 %v1862
        %v1883 = vpack.c.b16 %v1876, %v1875
        %v1884 = vpack.c.b16 %v1878, %v1877
        %v1885 = vpack.c.b16 %v1880, %v1879
        %v1886 = vpack.c.b16 %v1882, %v1881
        %vm1891 = vcmask 523264
        %v1893 = vsel %vm1891, %v1854, 0
        %1895 = vmatprep.subr.bf16.mxu0 0
        %1896 = vmatpush1.bf16.msra.mxu0 %v1883
        %1897 = vmatprep.subr.bf16.mxu0 0
        %1898 = vmatpush1.bf16.msra.mxu0 %v1884
        %1899 = vmatprep.subr.bf16.mxu0 0
        %1900 = vmatpush1.bf16.msra.mxu0 %v1885
        %1901 = vmatprep.subr.bf16.mxu0 0
        %1902 = vmatpush1.bf16.msra.mxu0 %v1886
        %1903 = vmatprep.subr.bf16.mxu0 0
        %1904 = vmatpush1.bf16.msra.mxu0 0
        %1905 = vmatprep.subr.bf16.mxu0 0
        %1906 = vmatpush1.bf16.msra.mxu0 0
        %1907 = vmatprep.subr.bf16.mxu0 0
        %1908 = vmatpush1.bf16.msra.mxu0 0
        %1909 = vmatprep.subr.bf16.mxu0 0
        %1910 = vmatpush1.bf16.msra.mxu0 0
        %1911 = vmatprep.subr.bf16.mxu0 0
        %1912 = vmatpush1.bf16.msra.mxu0 0
        %1913 = vmatprep.subr.bf16.mxu0 0
        %1914 = vmatpush1.bf16.msra.mxu0 0
        %1915 = vmatprep.subr.bf16.mxu0 0
        %1916 = vmatpush1.bf16.msra.mxu0 0
        %1917 = vmatprep.subr.bf16.mxu0 0
        %1918 = vmatpush1.bf16.msra.mxu0 0
        %1919 = vmatprep.subr.bf16.mxu0 0
        %1920 = vmatpush1.bf16.msra.mxu0 0
        %1921 = vmatprep.subr.bf16.mxu0 0
        %1922 = vmatpush1.bf16.msra.mxu0 0
        %1923 = vmatprep.subr.bf16.mxu0 0
        %1924 = vmatpush1.bf16.msra.mxu0 0
        %1925 = vmatprep.subr.bf16.mxu0 0
        %1926 = vmatpush1.bf16.msra.mxu0 0
        %1927 = vmatprep.mubr.bf16.mxu0 0
        %1928 = vmatmul.mubr.bf16.gmra.mrb[0].mxu0 %v1893
        %v1929 = vpop.f32.mrb[0].mxu0
        %v1930 = vadd.f32 %v1866, %v1929
        %v1931 = vpop.f32.mrb[0].mxu0
        %v1932 = vpop.f32.mrb[0].mxu0
        %v1933 = vpop.f32.mrb[0].mxu0
        %1934 = vdwg.mxu0
        %v1935 = vadd.f32 %v1759, %v1930
        %v1936 = vsel %vm402, %v1935, 0.0
        %1937 = vadd.xlane.f32.xlu0 %v1936
        %v1938 = vpop.xlane.xlu0 %1937
        %v1939 = vmul.f32 %v1938, %v1739
        %v1940 = vsub.f32 %v1935, %v1939
        %v1941 = vmul.f32 %v1940, %v1940
        %v1942 = vsel %vm402, %v1941, 0.0
        %1943 = vadd.xlane.f32.xlu0 %v1942
        %v1944 = vpop.xlane.xlu0 %1943
        %v1945 = vmul.f32 %v1944, %v1739
        %v1946 = vadd.f32 %v1945, 1e-05
        %v1947 = vrsqrt.pop %v1946
        %v1948 = vmul.f32 %v1940, %v1947
        %v1949 = vlaneseq
        %v1950 = vshrl.u32 %v1949, 7
        %v1951 = vsub.s32 4, %v1950
        %v1952 = vrot.slane %v1728, %v1951
        %v1953 = vmul.f32 %v1948, %v1952
        %v1954 = vlaneseq
        %v1955 = vshrl.u32 %v1954, 7
        %v1956 = vsub.s32 5, %v1955
        %v1957 = vrot.slane %v1728, %v1956
        %v1958 = vadd.f32 %v1953, %v1957
        %1959 = vst.msk [vmem:[%s385] sm:$0xff] %vm402, %v1958
        %s1960 = sand.u32 %s268, 1
        %s1961 = scalar_lea.sflag [#allocation4], %s1960
        %s1962 = sand.u32 %s268, 1
        %s1963 = smul.addr %s1962, 8
        %s1964 = scalar_lea.vmem [#allocation3], %s1963
        // Predicated region
        $region61: #{tpu_custom_call.1} parent=59 // pred_check
          %p1965 = pneg %p278
        $region62: #{tpu_custom_call.1} parent=59 // pred_check_branch
          %1967 = sbr.rel (%p1965) target = $region64
        $region63: #{tpu_custom_call.1} parent=59 // pred_region
          %s1969 = ssub.s32 128, 128
          %1970 = vsyncadd %s1961, %s1969
          %s1971 = sadd.s32 %s29, %s28
          %s1972 = smul.addr %s1971, 128
          %s1973 = scalar_lea.hbm %s10, %s1972
          %s1975 = sshll.u32 %s1964, 4
          %s1976 = int_to_ptr.vmem [resolvable:$true] %s1975
          %1978 = dma.vmem_to_hbm [thread:$0]  %s1976, 128, %s1973, %s1961
        $region64: #{tpu_custom_call.1} parent=59 // pred_fallthru
          _
      $region60: #{tpu_custom_call.1} parent=5 // pred_fallthru
        _
      %p1979 = scmp.le.s32.totalorder 2, %s19
      // Predicated region
      $region65: #{tpu_custom_call.1} parent=5 // pred_check
        %p1980 = pneg %p1979
      $region66: #{tpu_custom_call.1} parent=5 // pred_check_branch
        %1982 = sbr.rel (%p1980) target = $region68
      $region67: #{tpu_custom_call.1} parent=5 // pred_region
        %s1983 = ssub.s32 %s19, 2
        // Predicated region
        $region69: #{tpu_custom_call.1} parent=67 // pred_check
          %p1984 = pneg %p284
        $region70: #{tpu_custom_call.1} parent=67 // pred_check_branch
          %1986 = sbr.rel (%p1984) target = $region72
        $region71: #{tpu_custom_call.1} parent=67 // pred_region
          %s1987 = sand.u32 %s269, 1
          %s1988 = scalar_lea.sflag [#allocation4], %s1987
          %s1989 = sand.u32 %s269, 1
          %s1990 = smul.addr %s1989, 8
          %s1991 = scalar_lea.vmem [#allocation3], %s1990
          %1992 = dma.done %s1988, 128
        $region72: #{tpu_custom_call.1} parent=67 // pred_fallthru
          _
      $region68: #{tpu_custom_call.1} parent=5 // pred_fallthru
        _
    $region6: #{tpu_custom_call.1} parent=1 // loop_footer
      %s23 = sadd.s32 1, %s19
    $region7: #{tpu_custom_call.1} parent=1 // loop_footer_branch
      %18 = sbr.rel target = $region3
    $region8: #{tpu_custom_call.1} parent=1 // loop_exit
      _
    %1993 = vsyncpa [#allocation4], 1
    %s1994 = scalar_lea.sflag [#allocation4], 1
    %1995 = vsyncpa %s1994, 1

</llo_original>
